<compile_context>
chip_gen: v5e
topology: v5e:2x2
jax: 0.10.0
libtpu: 0.0.40
codegen_flags: <defaults>
</compile_context>

<pallas_src>
import functools

import jax
import jax.numpy as jnp
from jax import lax
from jax.experimental import pallas as pl
from jax.experimental.pallas import tpu as pltpu


def _round_up(x, m):
    return ((x + m - 1) // m) * m


def _pad_gate_cols(w, h, hp):
    """(R, 4*h) -> (R, 4*hp): zero-pad each of the 4 gate column blocks from h to hp."""
    if hp == h:
        return w
    r = w.shape[0]
    w4 = w.reshape(r, 4, h)
    w4 = jnp.pad(w4, ((0, 0), (0, 0), (0, hp - h)))
    return w4.reshape(r, 4 * hp)


def lstm_fc_kernel(xe_ref, wih_ref, bias_ref, whh_ref, wfc_ref, bfc_ref, out_ref,
                   h_ref, c_ref, xp_ref, *,
                   hp, t_blk, seq_len, needs_mask, t_unroll):
    """One grid step = one (batch block, time block).

    xe_ref  : (t_blk, B_blk, E)   streamed raw embedding rows (time-major)
    wih_ref : (E, 4*Hp)           resident input-projection weights
    bias_ref: (1, 4*Hp)           resident folded LSTM bias (b_ih + b_hh)
    whh_ref : (Hp, 4*Hp)          resident recurrent weights
    wfc_ref : (Hp, O_pad)         resident final linear weights
    bfc_ref : (1, O_pad)          resident final linear bias
    out_ref : (B_blk, O_pad)      logits, written only on the last time block
    h_ref, c_ref : (B_blk, Hp)    VMEM scratch, persistent across time blocks
    xp_ref  : (t_blk, B_blk, 4*Hp) VMEM scratch for the block's gate pre-activations
    """
    tb = pl.program_id(1)

    @pl.when(tb == 0)
    def _init():
        h_ref[...] = jnp.zeros_like(h_ref)
        c_ref[...] = jnp.zeros_like(c_ref)

    # Whole-block input projection + bias in one MXU call (off the serial critical path;
    # overlapped with the streamed-embedding DMA of the next block by the pipeline).
    t_b, b_b, e_dim = xe_ref.shape
    xe = xe_ref[...].reshape(t_b * b_b, e_dim)
    xp = jnp.dot(xe, wih_ref[...], preferred_element_type=jnp.float32) + bias_ref[...]
    xp_ref[...] = xp.reshape(t_b, b_b, 4 * hp)

    # Hoist the resident recurrent-weight read out of the recurrence loop.
    whh = whh_ref[...]

    def sig(x):
        # sigmoid(x) == 0.5*tanh(0.5*x) + 0.5 : one EUP tanh instead of exp + divide.
        return 0.5 * jnp.tanh(0.5 * x) + 0.5

    def step(t, carry):
        h_prev, c_prev = carry
        # Serial critical path: one (B_blk, Hp) @ (Hp, 4*Hp) matmul + gate math.
        pre = xp_ref[t] + jnp.dot(h_prev, whh, preferred_element_type=jnp.float32)
        # Gate slices are 128-lane aligned (Hp is a multiple of 128).
        i_g = sig(pre[:, 0 * hp:1 * hp])
        f_g = sig(pre[:, 1 * hp:2 * hp])
        g_g = jnp.tanh(pre[:, 2 * hp:3 * hp])
        o_g = sig(pre[:, 3 * hp:4 * hp])
        c_new = f_g * c_prev + i_g * g_g
        h_new = o_g * jnp.tanh(c_new)
        if needs_mask:
            # Padded trailing timesteps are not identity for an LSTM -> carry state through.
            valid = (tb * t_blk + t) < seq_len
            h_new = jnp.where(valid, h_new, h_prev)
            c_new = jnp.where(valid, c_new, c_prev)
        return h_new, c_new

    h_fin, c_fin = lax.fori_loop(0, t_blk, step, (h_ref[...], c_ref[...]),
                                 unroll=t_unroll)
    h_ref[...] = h_fin
    c_ref[...] = c_fin

    @pl.when(tb == pl.num_programs(1) - 1)
    def _final():
        out_ref[...] = (jnp.dot(h_fin, wfc_ref[...], preferred_element_type=jnp.float32)
                        + bfc_ref[...])


def lstm_model_forward(tokens, params, *, max_time_block=32):
    """tokens: (B, T) int32 -> logits (B, O) float32."""
    emb = params["embedding"]          # (V, E)
    wih_t = params["wih_t"]            # (E, 4H)
    whh_t = params["whh_t"]            # (H, 4H)
    bias = params["bias"]              # (1, 4H)  (b_ih + b_hh folded)
    wfc_t = params["wfc_t"]            # (H, O)
    bfc = params["bfc"]                # (1, O)

    B, T = tokens.shape
    E = emb.shape[1]
    H = whh_t.shape[0]
    O = wfc_t.shape[1]

    # ---- layout / padding ----
    Hp = max(128, _round_up(H, 128))            # lane-aligned per-gate width
    G = 4 * Hp
    O_pad = max(128, _round_up(O, 128))         # lane-dense final store
    if B <= 128:
        B_pad = max(8, _round_up(B, 8))         # f32 sublane count
        B_blk = B_pad
    else:
        B_pad = _round_up(B, 128)
        B_blk = 128

    t_blk = min(max_time_block, T)
    T_pad = _round_up(T, t_blk)
    needs_mask = (T_pad != T)
    t_unroll = min(t_blk, 8)                    # capped unroll: bounds icache/vreg pressure

    # Gate-aligned weight padding (zero columns between gates; zero rows for padded H).
    wih_p = _pad_gate_cols(wih_t, H, Hp)                                     # (E, 4Hp)
    bias_p = _pad_gate_cols(bias, H, Hp)                                     # (1, 4Hp)
    whh_p = jnp.pad(_pad_gate_cols(whh_t, H, Hp), ((0, Hp - H), (0, 0)))     # (Hp, 4Hp)
    wfc_p = jnp.pad(wfc_t, ((0, Hp - H), (0, O_pad - O)))                    # (Hp, O_pad)
    bfc_p = jnp.pad(bfc, ((0, 0), (0, O_pad - O)))                           # (1, O_pad)

    # Time-major embedding gather: only E columns per token are streamed; the 4H-wide gate
    # pre-activations are produced in-kernel by the resident W_ih matmul.
    # (Further HBM saving: move this gather in-kernel via scalar-prefetched token ids +
    #  manual row DMAs from an HBM-resident table; not needed at these sizes.)
    x_emb = jnp.take(emb, tokens.T, axis=0)                                  # (T, B, E)
    x_emb = jnp.pad(x_emb, ((0, T_pad - T), (0, B_pad - B), (0, 0)))         # (T_pad, B_pad, E)

    grid = (B_pad // B_blk, T_pad // t_blk)

    # ---- explicit VMEM budget (weights double-buffered by default, streamed block x2,
    #      single-buffered scratch) ----
    isz = 4
    needed = (2 * t_blk * B_blk * E * isz                       # streamed embedding block
              + 2 * (E * G + G + Hp * G + Hp * O_pad + O_pad) * isz   # resident weights/bias
              + 2 * B_blk * O_pad * isz                         # output block
              + (2 * B_blk * Hp + t_blk * B_blk * G) * isz)     # h/c + xp scratch
    vmem_limit = min(100 * 1024 * 1024, max(32 * 1024 * 1024, 2 * needed))
    try:
        vmem_limit = min(vmem_limit, int(0.9 * pltpu.get_tpu_info().vmem_capacity_bytes))
    except Exception:
        pass

    kernel = functools.partial(lstm_fc_kernel, hp=Hp, t_blk=t_blk, seq_len=T,
                               needs_mask=needs_mask, t_unroll=t_unroll)

    out_pad = pl.pallas_call(
        kernel,
        out_shape=jax.ShapeDtypeStruct((B_pad, O_pad), jnp.float32),
        grid_spec=pltpu.PrefetchScalarGridSpec(
            num_scalar_prefetch=0,
            grid=grid,
            in_specs=[
                # Streamed raw-embedding time blocks (double-buffered by Pallas).
                pl.BlockSpec((t_blk, B_blk, E), lambda bb, tb: (tb, bb, 0)),
                # Resident weights / biases (constant index maps).
                # (For production-sized H, add pipeline_mode=pl.Buffered(1) here to avoid the
                #  default 2x buffering of these never-changing blocks.)
                pl.BlockSpec((E, G), lambda bb, tb: (0, 0)),
                pl.BlockSpec((1, G), lambda bb, tb: (0, 0)),
                pl.BlockSpec((Hp, G), lambda bb, tb: (0, 0)),
                pl.BlockSpec((Hp, O_pad), lambda bb, tb: (0, 0)),
                pl.BlockSpec((1, O_pad), lambda bb, tb: (0, 0)),
            ],
            out_specs=pl.BlockSpec((B_blk, O_pad), lambda bb, tb: (bb, 0)),
            scratch_shapes=[
                pltpu.VMEM((B_blk, Hp), jnp.float32),        # h (persists across time blocks)
                pltpu.VMEM((B_blk, Hp), jnp.float32),        # c
                pltpu.VMEM((t_blk, B_blk, G), jnp.float32),  # per-block gate pre-activations
            ],
        ),
        compiler_params=pltpu.CompilerParams(
            # batch blocks are independent (megacore-shardable); time is a serial recurrence
            dimension_semantics=("parallel", "arbitrary"),
            vmem_limit_bytes=int(vmem_limit)),
    )(x_emb, wih_p, bias_p, whh_p, wfc_p, bfc_p)

    return out_pad[:B, :O]


def lstm_model_reference(tokens, params):
    """Pure-JAX reference mirroring torch.nn.LSTM semantics (gate order i,f,g,o)."""
    emb = params["embedding"]
    wih_t = params["wih_t"]
    whh_t = params["whh_t"]
    bias = params["bias"]
    wfc_t = params["wfc_t"]
    bfc = params["bfc"]

    B, T = tokens.shape
    H = whh_t.shape[0]
    embedded = jnp.take(emb, tokens, axis=0)               # (B, T, E)

    h = jnp.zeros((B, H), jnp.float32)
    c = jnp.zeros((B, H), jnp.float32)
    for t in range(T):
        xt = embedded[:, t, :]
        pre = xt @ wih_t + h @ whh_t + bias
        i_g = jax.nn.sigmoid(pre[:, 0 * H:1 * H])
        f_g = jax.nn.sigmoid(pre[:, 1 * H:2 * H])
        g_g = jnp.tanh(pre[:, 2 * H:3 * H])
        o_g = jax.nn.sigmoid(pre[:, 3 * H:4 * H])
        c = f_g * c + i_g * g_g
        h = o_g * jnp.tanh(c)
    return h @ wfc_t + bfc


def init_params(key, vocab_size, embedding_dim, hidden_dim, output_dim):
    ks = jax.random.split(key, 7)
    scale = 0.1
    params = {
        "embedding": scale * jax.random.normal(ks[0], (vocab_size, embedding_dim), jnp.float32),
        # torch stores W_ih (4H, E) / W_hh (4H, H); we pass transposes for x @ W^T.
        "wih_t": scale * jax.random.normal(ks[1], (embedding_dim, 4 * hidden_dim), jnp.float32),
        "whh_t": scale * jax.random.normal(ks[2], (hidden_dim, 4 * hidden_dim), jnp.float32),
        # torch has b_ih + b_hh; fold both into one combined bias row.
        "bias": scale * jax.random.normal(ks[3], (1, 4 * hidden_dim), jnp.float32),
        "wfc_t": scale * jax.random.normal(ks[4], (hidden_dim, output_dim), jnp.float32),
        "bfc": scale * jax.random.normal(ks[5], (1, output_dim), jnp.float32),
    }
    return params


if __name__ == "__main__":
    # Small, module-consistent shapes.
    # TODO(synk): the NLTK text preprocessing / vocab construction is host-side Python and has
    # no Pallas equivalent; token ids are generated directly here.
    vocab_size = 50
    embedding_dim = 16
    hidden_dim = 32
    output_dim = 4
    batch = 2
    seq_len = 8

    key = jax.random.PRNGKey(0)
    pkey, tkey, tkey2 = jax.random.split(key, 3)
    params = init_params(pkey, vocab_size, embedding_dim, hidden_dim, output_dim)
    tokens = jax.random.randint(tkey, (batch, seq_len), 0, vocab_size, dtype=jnp.int32)

    out = lstm_model_forward(tokens, params)
    out = jax.block_until_ready(out)

    ref = lstm_model_reference(tokens, params)
    assert out.shape == (batch, output_dim)
    assert jnp.allclose(out, ref, atol=1e-5, rtol=1e-5), "Pallas kernel mismatch vs reference"

    # Exercise the ragged-T / multi-time-block / masked-tail path as well.
    seq_len2 = 11
    tokens2 = jax.random.randint(tkey2, (batch, seq_len2), 0, vocab_size, dtype=jnp.int32)
    out2 = jax.block_until_ready(lstm_model_forward(tokens2, params, max_time_block=4))
    ref2 = lstm_model_reference(tokens2, params)
    assert jnp.allclose(out2, ref2, atol=1e-5, rtol=1e-5), "ragged-T path mismatch vs reference"

    print("KERNEL_OK")
</pallas_src>

<mosaic_0001>
module attributes {stable_mosaic.version = 11 : i64} {
  func.func @lstm_fc_kernel(%arg0: i32, %arg1: i32, %arg2: memref<8x8x16xf32, #tpu.memory_space<vmem>>, %arg3: memref<16x512xf32, #tpu.memory_space<vmem>>, %arg4: memref<1x512xf32, #tpu.memory_space<vmem>>, %arg5: memref<128x512xf32, #tpu.memory_space<vmem>>, %arg6: memref<128x128xf32, #tpu.memory_space<vmem>>, %arg7: memref<1x128xf32, #tpu.memory_space<vmem>>, %arg8: memref<8x128xf32, #tpu.memory_space<vmem>>, %arg9: memref<8x128xf32, #tpu.memory_space<vmem>>, %arg10: memref<8x128xf32, #tpu.memory_space<vmem>>, %arg11: memref<8x8x512xf32, #tpu.memory_space<vmem>>) attributes {dimension_semantics = [#tpu.dimension_semantics<parallel>, #tpu.dimension_semantics<arbitrary>], iteration_bounds = array<i64: 1, 1>, scalar_prefetch = 0 : i64, scratch_operands = 3 : i64, tpu.core_type = #tpu.core_type<tc>, window_params = [{transform_indices = @transform_0, window_bounds = array<i64: 8, 8, 16>}, {pipeline_mode = #tpu.pipeline_mode<synchronous>, transform_indices = @transform_1, window_bounds = array<i64: 16, 512>}, {pipeline_mode = #tpu.pipeline_mode<synchronous>, transform_indices = @transform_2, window_bounds = array<i64: 1, 512>}, {pipeline_mode = #tpu.pipeline_mode<synchronous>, transform_indices = @transform_3, window_bounds = array<i64: 128, 512>}, {pipeline_mode = #tpu.pipeline_mode<synchronous>, transform_indices = @transform_4, window_bounds = array<i64: 128, 128>}, {pipeline_mode = #tpu.pipeline_mode<synchronous>, transform_indices = @transform_5, window_bounds = array<i64: 1, 128>}, {transform_indices = @transform_6, window_bounds = array<i64: 8, 128>}]} {
    %c0_i32 = arith.constant 0 : i32
    %0 = arith.cmpi eq, %arg1, %c0_i32 : i32
    %1 = arith.extui %0 : i1 to i32
    %c0_i32_0 = arith.constant 0 : i32
    %2 = arith.cmpi ne, %1, %c0_i32_0 : i32
    scf.if %2 {
      %cst_119 = arith.constant 0.000000e+00 : f32
      %308 = vector.broadcast %cst_119 : f32 to vector<8x128xf32>
      %c0_120 = arith.constant 0 : index
      %c0_121 = arith.constant 0 : index
      %309 = vector.load %arg9[%c0_120, %c0_121] : memref<8x128xf32, #tpu.memory_space<vmem>>, vector<8x128xf32>
      tpu.vector_store %arg9[%c0_120, %c0_121], %308 {strides = array<i32>} : memref<8x128xf32, #tpu.memory_space<vmem>>, vector<8x128xf32>,
      %cst_122 = arith.constant 0.000000e+00 : f32
      %310 = vector.broadcast %cst_122 : f32 to vector<8x128xf32>
      %c0_123 = arith.constant 0 : index
      %c0_124 = arith.constant 0 : index
      %311 = vector.load %arg10[%c0_123, %c0_124] : memref<8x128xf32, #tpu.memory_space<vmem>>, vector<8x128xf32>
      tpu.vector_store %arg10[%c0_123, %c0_124], %310 {strides = array<i32>} : memref<8x128xf32, #tpu.memory_space<vmem>>, vector<8x128xf32>,
    } else {
    }
    %c0 = arith.constant 0 : index
    %c0_1 = arith.constant 0 : index
    %c0_2 = arith.constant 0 : index
    %3 = vector.load %arg2[%c0, %c0_1, %c0_2] : memref<8x8x16xf32, #tpu.memory_space<vmem>>, vector<8x8x16xf32>
    %4 = vector.shape_cast %3 : vector<8x8x16xf32> to vector<64x16xf32>
    %c0_3 = arith.constant 0 : index
    %c0_4 = arith.constant 0 : index
    %5 = vector.load %arg3[%c0_3, %c0_4] : memref<16x512xf32, #tpu.memory_space<vmem>>, vector<16x512xf32>
    %cst = arith.constant dense<0.000000e+00> : vector<64x512xf32>
    %6 = tpu.matmul %4, %5, %cst {dimension_numbers = #tpu.dot_dimension_numbers<[1], [0], [0], [1], [0, 0, 1, 1], [], []>} : vector<64x16xf32>, vector<16x512xf32>, vector<64x512xf32> -> vector<64x512xf32>
    %c0_5 = arith.constant 0 : index
    %c0_6 = arith.constant 0 : index
    %7 = vector.load %arg4[%c0_5, %c0_6] : memref<1x512xf32, #tpu.memory_space<vmem>>, vector<1x512xf32>
    %8 = vector.broadcast %7 : vector<1x512xf32> to vector<64x512xf32>
    %9 = arith.addf %6, %8 : vector<64x512xf32>
    %10 = vector.shape_cast %9 : vector<64x512xf32> to vector<8x8x512xf32>
    %c0_7 = arith.constant 0 : index
    %c0_8 = arith.constant 0 : index
    %c0_9 = arith.constant 0 : index
    %11 = vector.load %arg11[%c0_7, %c0_8, %c0_9] : memref<8x8x512xf32, #tpu.memory_space<vmem>>, vector<8x8x512xf32>
    tpu.vector_store %arg11[%c0_7, %c0_8, %c0_9], %10 {strides = array<i32>} : memref<8x8x512xf32, #tpu.memory_space<vmem>>, vector<8x8x512xf32>,
    %c0_10 = arith.constant 0 : index
    %c0_11 = arith.constant 0 : index
    %12 = vector.load %arg5[%c0_10, %c0_11] : memref<128x512xf32, #tpu.memory_space<vmem>>, vector<128x512xf32>
    %c0_12 = arith.constant 0 : index
    %c0_13 = arith.constant 0 : index
    %13 = vector.load %arg9[%c0_12, %c0_13] : memref<8x128xf32, #tpu.memory_space<vmem>>, vector<8x128xf32>
    %c0_14 = arith.constant 0 : index
    %c0_15 = arith.constant 0 : index
    %14 = vector.load %arg10[%c0_14, %c0_15] : memref<8x128xf32, #tpu.memory_space<vmem>>, vector<8x128xf32>
    %c0_i32_16 = arith.constant 0 : i32
    %15 = arith.index_cast %c0_i32_16 : i32 to index
    %c0_17 = arith.constant 0 : index
    %c0_18 = arith.constant 0 : index
    %16 = vector.load %arg11[%15, %c0_17, %c0_18] : memref<8x8x512xf32, #tpu.memory_space<vmem>>, vector<1x8x512xf32>
    %17 = vector.shape_cast %16 : vector<1x8x512xf32> to vector<8x512xf32>
    %cst_19 = arith.constant dense<0.000000e+00> : vector<8x512xf32>
    %18 = tpu.matmul %13, %12, %cst_19 {dimension_numbers = #tpu.dot_dimension_numbers<[1], [0], [0], [1], [0, 0, 1, 1], [], []>} : vector<8x128xf32>, vector<128x512xf32>, vector<8x512xf32> -> vector<8x512xf32>
    %19 = arith.addf %17, %18 : vector<8x512xf32>
    %20 = vector.extract_strided_slice %19 {offsets = [0, 0], sizes = [8, 128], strides = [1, 1]} : vector<8x512xf32> to vector<8x128xf32>
    %cst_20 = arith.constant 5.000000e-01 : f32
    %21 = vector.broadcast %cst_20 : f32 to vector<8x128xf32>
    %22 = arith.mulf %21, %20 : vector<8x128xf32>
    %23 = math.tanh %22 : vector<8x128xf32>
    %cst_21 = arith.constant 5.000000e-01 : f32
    %24 = vector.broadcast %cst_21 : f32 to vector<8x128xf32>
    %25 = arith.mulf %24, %23 : vector<8x128xf32>
    %cst_22 = arith.constant 5.000000e-01 : f32
    %26 = vector.broadcast %cst_22 : f32 to vector<8x128xf32>
    %27 = arith.addf %25, %26 : vector<8x128xf32>
    %28 = vector.extract_strided_slice %19 {offsets = [0, 128], sizes = [8, 128], strides = [1, 1]} : vector<8x512xf32> to vector<8x128xf32>
    %cst_23 = arith.constant 5.000000e-01 : f32
    %29 = vector.broadcast %cst_23 : f32 to vector<8x128xf32>
    %30 = arith.mulf %29, %28 : vector<8x128xf32>
    %31 = math.tanh %30 : vector<8x128xf32>
    %cst_24 = arith.constant 5.000000e-01 : f32
    %32 = vector.broadcast %cst_24 : f32 to vector<8x128xf32>
    %33 = arith.mulf %32, %31 : vector<8x128xf32>
    %cst_25 = arith.constant 5.000000e-01 : f32
    %34 = vector.broadcast %cst_25 : f32 to vector<8x128xf32>
    %35 = arith.addf %33, %34 : vector<8x128xf32>
    %36 = vector.extract_strided_slice %19 {offsets = [0, 256], sizes = [8, 128], strides = [1, 1]} : vector<8x512xf32> to vector<8x128xf32>
    %37 = math.tanh %36 : vector<8x128xf32>
    %38 = vector.extract_strided_slice %19 {offsets = [0, 384], sizes = [8, 128], strides = [1, 1]} : vector<8x512xf32> to vector<8x128xf32>
    %cst_26 = arith.constant 5.000000e-01 : f32
    %39 = vector.broadcast %cst_26 : f32 to vector<8x128xf32>
    %40 = arith.mulf %39, %38 : vector<8x128xf32>
    %41 = math.tanh %40 : vector<8x128xf32>
    %cst_27 = arith.constant 5.000000e-01 : f32
    %42 = vector.broadcast %cst_27 : f32 to vector<8x128xf32>
    %43 = arith.mulf %42, %41 : vector<8x128xf32>
    %cst_28 = arith.constant 5.000000e-01 : f32
    %44 = vector.broadcast %cst_28 : f32 to vector<8x128xf32>
    %45 = arith.addf %43, %44 : vector<8x128xf32>
    %46 = arith.mulf %35, %14 : vector<8x128xf32>
    %47 = arith.mulf %27, %37 : vector<8x128xf32>
    %48 = arith.addf %46, %47 : vector<8x128xf32>
    %49 = math.tanh %48 : vector<8x128xf32>
    %50 = arith.mulf %45, %49 : vector<8x128xf32>
    %c1_i32 = arith.constant 1 : i32
    %51 = arith.index_cast %c1_i32 : i32 to index
    %c0_29 = arith.constant 0 : index
    %c0_30 = arith.constant 0 : index
    %52 = vector.load %arg11[%51, %c0_29, %c0_30] : memref<8x8x512xf32, #tpu.memory_space<vmem>>, vector<1x8x512xf32>
    %53 = vector.shape_cast %52 : vector<1x8x512xf32> to vector<8x512xf32>
    %cst_31 = arith.constant dense<0.000000e+00> : vector<8x512xf32>
    %54 = tpu.matmul %50, %12, %cst_31 {dimension_numbers = #tpu.dot_dimension_numbers<[1], [0], [0], [1], [0, 0, 1, 1], [], []>} : vector<8x128xf32>, vector<128x512xf32>, vector<8x512xf32> -> vector<8x512xf32>
    %55 = arith.addf %53, %54 : vector<8x512xf32>
    %56 = vector.extract_strided_slice %55 {offsets = [0, 0], sizes = [8, 128], strides = [1, 1]} : vector<8x512xf32> to vector<8x128xf32>
    %cst_32 = arith.constant 5.000000e-01 : f32
    %57 = vector.broadcast %cst_32 : f32 to vector<8x128xf32>
    %58 = arith.mulf %57, %56 : vector<8x128xf32>
    %59 = math.tanh %58 : vector<8x128xf32>
    %cst_33 = arith.constant 5.000000e-01 : f32
    %60 = vector.broadcast %cst_33 : f32 to vector<8x128xf32>
    %61 = arith.mulf %60, %59 : vector<8x128xf32>
    %cst_34 = arith.constant 5.000000e-01 : f32
    %62 = vector.broadcast %cst_34 : f32 to vector<8x128xf32>
    %63 = arith.addf %61, %62 : vector<8x128xf32>
    %64 = vector.extract_strided_slice %55 {offsets = [0, 128], sizes = [8, 128], strides = [1, 1]} : vector<8x512xf32> to vector<8x128xf32>
    %cst_35 = arith.constant 5.000000e-01 : f32
    %65 = vector.broadcast %cst_35 : f32 to vector<8x128xf32>
    %66 = arith.mulf %65, %64 : vector<8x128xf32>
    %67 = math.tanh %66 : vector<8x128xf32>
    %cst_36 = arith.constant 5.000000e-01 : f32
    %68 = vector.broadcast %cst_36 : f32 to vector<8x128xf32>
    %69 = arith.mulf %68, %67 : vector<8x128xf32>
    %cst_37 = arith.constant 5.000000e-01 : f32
    %70 = vector.broadcast %cst_37 : f32 to vector<8x128xf32>
    %71 = arith.addf %69, %70 : vector<8x128xf32>
    %72 = vector.extract_strided_slice %55 {offsets = [0, 256], sizes = [8, 128], strides = [1, 1]} : vector<8x512xf32> to vector<8x128xf32>
    %73 = math.tanh %72 : vector<8x128xf32>
    %74 = vector.extract_strided_slice %55 {offsets = [0, 384], sizes = [8, 128], strides = [1, 1]} : vector<8x512xf32> to vector<8x128xf32>
    %cst_38 = arith.constant 5.000000e-01 : f32
    %75 = vector.broadcast %cst_38 : f32 to vector<8x128xf32>
    %76 = arith.mulf %75, %74 : vector<8x128xf32>
    %77 = math.tanh %76 : vector<8x128xf32>
    %cst_39 = arith.constant 5.000000e-01 : f32
    %78 = vector.broadcast %cst_39 : f32 to vector<8x128xf32>
    %79 = arith.mulf %78, %77 : vector<8x128xf32>
    %cst_40 = arith.constant 5.000000e-01 : f32
    %80 = vector.broadcast %cst_40 : f32 to vector<8x128xf32>
    %81 = arith.addf %79, %80 : vector<8x128xf32>
    %82 = arith.mulf %71, %48 : vector<8x128xf32>
    %83 = arith.mulf %63, %73 : vector<8x128xf32>
    %84 = arith.addf %82, %83 : vector<8x128xf32>
    %85 = math.tanh %84 : vector<8x128xf32>
    %86 = arith.mulf %81, %85 : vector<8x128xf32>
    %c2_i32 = arith.constant 2 : i32
    %87 = arith.index_cast %c2_i32 : i32 to index
    %c0_41 = arith.constant 0 : index
    %c0_42 = arith.constant 0 : index
    %88 = vector.load %arg11[%87, %c0_41, %c0_42] : memref<8x8x512xf32, #tpu.memory_space<vmem>>, vector<1x8x512xf32>
    %89 = vector.shape_cast %88 : vector<1x8x512xf32> to vector<8x512xf32>
    %cst_43 = arith.constant dense<0.000000e+00> : vector<8x512xf32>
    %90 = tpu.matmul %86, %12, %cst_43 {dimension_numbers = #tpu.dot_dimension_numbers<[1], [0], [0], [1], [0, 0, 1, 1], [], []>} : vector<8x128xf32>, vector<128x512xf32>, vector<8x512xf32> -> vector<8x512xf32>
    %91 = arith.addf %89, %90 : vector<8x512xf32>
    %92 = vector.extract_strided_slice %91 {offsets = [0, 0], sizes = [8, 128], strides = [1, 1]} : vector<8x512xf32> to vector<8x128xf32>
    %cst_44 = arith.constant 5.000000e-01 : f32
    %93 = vector.broadcast %cst_44 : f32 to vector<8x128xf32>
    %94 = arith.mulf %93, %92 : vector<8x128xf32>
    %95 = math.tanh %94 : vector<8x128xf32>
    %cst_45 = arith.constant 5.000000e-01 : f32
    %96 = vector.broadcast %cst_45 : f32 to vector<8x128xf32>
    %97 = arith.mulf %96, %95 : vector<8x128xf32>
    %cst_46 = arith.constant 5.000000e-01 : f32
    %98 = vector.broadcast %cst_46 : f32 to vector<8x128xf32>
    %99 = arith.addf %97, %98 : vector<8x128xf32>
    %100 = vector.extract_strided_slice %91 {offsets = [0, 128], sizes = [8, 128], strides = [1, 1]} : vector<8x512xf32> to vector<8x128xf32>
    %cst_47 = arith.constant 5.000000e-01 : f32
    %101 = vector.broadcast %cst_47 : f32 to vector<8x128xf32>
    %102 = arith.mulf %101, %100 : vector<8x128xf32>
    %103 = math.tanh %102 : vector<8x128xf32>
    %cst_48 = arith.constant 5.000000e-01 : f32
    %104 = vector.broadcast %cst_48 : f32 to vector<8x128xf32>
    %105 = arith.mulf %104, %103 : vector<8x128xf32>
    %cst_49 = arith.constant 5.000000e-01 : f32
    %106 = vector.broadcast %cst_49 : f32 to vector<8x128xf32>
    %107 = arith.addf %105, %106 : vector<8x128xf32>
    %108 = vector.extract_strided_slice %91 {offsets = [0, 256], sizes = [8, 128], strides = [1, 1]} : vector<8x512xf32> to vector<8x128xf32>
    %109 = math.tanh %108 : vector<8x128xf32>
    %110 = vector.extract_strided_slice %91 {offsets = [0, 384], sizes = [8, 128], strides = [1, 1]} : vector<8x512xf32> to vector<8x128xf32>
    %cst_50 = arith.constant 5.000000e-01 : f32
    %111 = vector.broadcast %cst_50 : f32 to vector<8x128xf32>
    %112 = arith.mulf %111, %110 : vector<8x128xf32>
    %113 = math.tanh %112 : vector<8x128xf32>
    %cst_51 = arith.constant 5.000000e-01 : f32
    %114 = vector.broadcast %cst_51 : f32 to vector<8x128xf32>
    %115 = arith.mulf %114, %113 : vector<8x128xf32>
    %cst_52 = arith.constant 5.000000e-01 : f32
    %116 = vector.broadcast %cst_52 : f32 to vector<8x128xf32>
    %117 = arith.addf %115, %116 : vector<8x128xf32>
    %118 = arith.mulf %107, %84 : vector<8x128xf32>
    %119 = arith.mulf %99, %109 : vector<8x128xf32>
    %120 = arith.addf %118, %119 : vector<8x128xf32>
    %121 = math.tanh %120 : vector<8x128xf32>
    %122 = arith.mulf %117, %121 : vector<8x128xf32>
    %c3_i32 = arith.constant 3 : i32
    %123 = arith.index_cast %c3_i32 : i32 to index
    %c0_53 = arith.constant 0 : index
    %c0_54 = arith.constant 0 : index
    %124 = vector.load %arg11[%123, %c0_53, %c0_54] : memref<8x8x512xf32, #tpu.memory_space<vmem>>, vector<1x8x512xf32>
    %125 = vector.shape_cast %124 : vector<1x8x512xf32> to vector<8x512xf32>
    %cst_55 = arith.constant dense<0.000000e+00> : vector<8x512xf32>
    %126 = tpu.matmul %122, %12, %cst_55 {dimension_numbers = #tpu.dot_dimension_numbers<[1], [0], [0], [1], [0, 0, 1, 1], [], []>} : vector<8x128xf32>, vector<128x512xf32>, vector<8x512xf32> -> vector<8x512xf32>
    %127 = arith.addf %125, %126 : vector<8x512xf32>
    %128 = vector.extract_strided_slice %127 {offsets = [0, 0], sizes = [8, 128], strides = [1, 1]} : vector<8x512xf32> to vector<8x128xf32>
    %cst_56 = arith.constant 5.000000e-01 : f32
    %129 = vector.broadcast %cst_56 : f32 to vector<8x128xf32>
    %130 = arith.mulf %129, %128 : vector<8x128xf32>
    %131 = math.tanh %130 : vector<8x128xf32>
    %cst_57 = arith.constant 5.000000e-01 : f32
    %132 = vector.broadcast %cst_57 : f32 to vector<8x128xf32>
    %133 = arith.mulf %132, %131 : vector<8x128xf32>
    %cst_58 = arith.constant 5.000000e-01 : f32
    %134 = vector.broadcast %cst_58 : f32 to vector<8x128xf32>
    %135 = arith.addf %133, %134 : vector<8x128xf32>
    %136 = vector.extract_strided_slice %127 {offsets = [0, 128], sizes = [8, 128], strides = [1, 1]} : vector<8x512xf32> to vector<8x128xf32>
    %cst_59 = arith.constant 5.000000e-01 : f32
    %137 = vector.broadcast %cst_59 : f32 to vector<8x128xf32>
    %138 = arith.mulf %137, %136 : vector<8x128xf32>
    %139 = math.tanh %138 : vector<8x128xf32>
    %cst_60 = arith.constant 5.000000e-01 : f32
    %140 = vector.broadcast %cst_60 : f32 to vector<8x128xf32>
    %141 = arith.mulf %140, %139 : vector<8x128xf32>
    %cst_61 = arith.constant 5.000000e-01 : f32
    %142 = vector.broadcast %cst_61 : f32 to vector<8x128xf32>
    %143 = arith.addf %141, %142 : vector<8x128xf32>
    %144 = vector.extract_strided_slice %127 {offsets = [0, 256], sizes = [8, 128], strides = [1, 1]} : vector<8x512xf32> to vector<8x128xf32>
    %145 = math.tanh %144 : vector<8x128xf32>
    %146 = vector.extract_strided_slice %127 {offsets = [0, 384], sizes = [8, 128], strides = [1, 1]} : vector<8x512xf32> to vector<8x128xf32>
    %cst_62 = arith.constant 5.000000e-01 : f32
    %147 = vector.broadcast %cst_62 : f32 to vector<8x128xf32>
    %148 = arith.mulf %147, %146 : vector<8x128xf32>
    %149 = math.tanh %148 : vector<8x128xf32>
    %cst_63 = arith.constant 5.000000e-01 : f32
    %150 = vector.broadcast %cst_63 : f32 to vector<8x128xf32>
    %151 = arith.mulf %150, %149 : vector<8x128xf32>
    %cst_64 = arith.constant 5.000000e-01 : f32
    %152 = vector.broadcast %cst_64 : f32 to vector<8x128xf32>
    %153 = arith.addf %151, %152 : vector<8x128xf32>
    %154 = arith.mulf %143, %120 : vector<8x128xf32>
    %155 = arith.mulf %135, %145 : vector<8x128xf32>
    %156 = arith.addf %154, %155 : vector<8x128xf32>
    %157 = math.tanh %156 : vector<8x128xf32>
    %158 = arith.mulf %153, %157 : vector<8x128xf32>
    %c4_i32 = arith.constant 4 : i32
    %159 = arith.index_cast %c4_i32 : i32 to index
    %c0_65 = arith.constant 0 : index
    %c0_66 = arith.constant 0 : index
    %160 = vector.load %arg11[%159, %c0_65, %c0_66] : memref<8x8x512xf32, #tpu.memory_space<vmem>>, vector<1x8x512xf32>
    %161 = vector.shape_cast %160 : vector<1x8x512xf32> to vector<8x512xf32>
    %cst_67 = arith.constant dense<0.000000e+00> : vector<8x512xf32>
    %162 = tpu.matmul %158, %12, %cst_67 {dimension_numbers = #tpu.dot_dimension_numbers<[1], [0], [0], [1], [0, 0, 1, 1], [], []>} : vector<8x128xf32>, vector<128x512xf32>, vector<8x512xf32> -> vector<8x512xf32>
    %163 = arith.addf %161, %162 : vector<8x512xf32>
    %164 = vector.extract_strided_slice %163 {offsets = [0, 0], sizes = [8, 128], strides = [1, 1]} : vector<8x512xf32> to vector<8x128xf32>
    %cst_68 = arith.constant 5.000000e-01 : f32
    %165 = vector.broadcast %cst_68 : f32 to vector<8x128xf32>
    %166 = arith.mulf %165, %164 : vector<8x128xf32>
    %167 = math.tanh %166 : vector<8x128xf32>
    %cst_69 = arith.constant 5.000000e-01 : f32
    %168 = vector.broadcast %cst_69 : f32 to vector<8x128xf32>
    %169 = arith.mulf %168, %167 : vector<8x128xf32>
    %cst_70 = arith.constant 5.000000e-01 : f32
    %170 = vector.broadcast %cst_70 : f32 to vector<8x128xf32>
    %171 = arith.addf %169, %170 : vector<8x128xf32>
    %172 = vector.extract_strided_slice %163 {offsets = [0, 128], sizes = [8, 128], strides = [1, 1]} : vector<8x512xf32> to vector<8x128xf32>
    %cst_71 = arith.constant 5.000000e-01 : f32
    %173 = vector.broadcast %cst_71 : f32 to vector<8x128xf32>
    %174 = arith.mulf %173, %172 : vector<8x128xf32>
    %175 = math.tanh %174 : vector<8x128xf32>
    %cst_72 = arith.constant 5.000000e-01 : f32
    %176 = vector.broadcast %cst_72 : f32 to vector<8x128xf32>
    %177 = arith.mulf %176, %175 : vector<8x128xf32>
    %cst_73 = arith.constant 5.000000e-01 : f32
    %178 = vector.broadcast %cst_73 : f32 to vector<8x128xf32>
    %179 = arith.addf %177, %178 : vector<8x128xf32>
    %180 = vector.extract_strided_slice %163 {offsets = [0, 256], sizes = [8, 128], strides = [1, 1]} : vector<8x512xf32> to vector<8x128xf32>
    %181 = math.tanh %180 : vector<8x128xf32>
    %182 = vector.extract_strided_slice %163 {offsets = [0, 384], sizes = [8, 128], strides = [1, 1]} : vector<8x512xf32> to vector<8x128xf32>
    %cst_74 = arith.constant 5.000000e-01 : f32
    %183 = vector.broadcast %cst_74 : f32 to vector<8x128xf32>
    %184 = arith.mulf %183, %182 : vector<8x128xf32>
    %185 = math.tanh %184 : vector<8x128xf32>
    %cst_75 = arith.constant 5.000000e-01 : f32
    %186 = vector.broadcast %cst_75 : f32 to vector<8x128xf32>
    %187 = arith.mulf %186, %185 : vector<8x128xf32>
    %cst_76 = arith.constant 5.000000e-01 : f32
    %188 = vector.broadcast %cst_76 : f32 to vector<8x128xf32>
    %189 = arith.addf %187, %188 : vector<8x128xf32>
    %190 = arith.mulf %179, %156 : vector<8x128xf32>
    %191 = arith.mulf %171, %181 : vector<8x128xf32>
    %192 = arith.addf %190, %191 : vector<8x128xf32>
    %193 = math.tanh %192 : vector<8x128xf32>
    %194 = arith.mulf %189, %193 : vector<8x128xf32>
    %c5_i32 = arith.constant 5 : i32
    %195 = arith.index_cast %c5_i32 : i32 to index
    %c0_77 = arith.constant 0 : index
    %c0_78 = arith.constant 0 : index
    %196 = vector.load %arg11[%195, %c0_77, %c0_78] : memref<8x8x512xf32, #tpu.memory_space<vmem>>, vector<1x8x512xf32>
    %197 = vector.shape_cast %196 : vector<1x8x512xf32> to vector<8x512xf32>
    %cst_79 = arith.constant dense<0.000000e+00> : vector<8x512xf32>
    %198 = tpu.matmul %194, %12, %cst_79 {dimension_numbers = #tpu.dot_dimension_numbers<[1], [0], [0], [1], [0, 0, 1, 1], [], []>} : vector<8x128xf32>, vector<128x512xf32>, vector<8x512xf32> -> vector<8x512xf32>
    %199 = arith.addf %197, %198 : vector<8x512xf32>
    %200 = vector.extract_strided_slice %199 {offsets = [0, 0], sizes = [8, 128], strides = [1, 1]} : vector<8x512xf32> to vector<8x128xf32>
    %cst_80 = arith.constant 5.000000e-01 : f32
    %201 = vector.broadcast %cst_80 : f32 to vector<8x128xf32>
    %202 = arith.mulf %201, %200 : vector<8x128xf32>
    %203 = math.tanh %202 : vector<8x128xf32>
    %cst_81 = arith.constant 5.000000e-01 : f32
    %204 = vector.broadcast %cst_81 : f32 to vector<8x128xf32>
    %205 = arith.mulf %204, %203 : vector<8x128xf32>
    %cst_82 = arith.constant 5.000000e-01 : f32
    %206 = vector.broadcast %cst_82 : f32 to vector<8x128xf32>
    %207 = arith.addf %205, %206 : vector<8x128xf32>
    %208 = vector.extract_strided_slice %199 {offsets = [0, 128], sizes = [8, 128], strides = [1, 1]} : vector<8x512xf32> to vector<8x128xf32>
    %cst_83 = arith.constant 5.000000e-01 : f32
    %209 = vector.broadcast %cst_83 : f32 to vector<8x128xf32>
    %210 = arith.mulf %209, %208 : vector<8x128xf32>
    %211 = math.tanh %210 : vector<8x128xf32>
    %cst_84 = arith.constant 5.000000e-01 : f32
    %212 = vector.broadcast %cst_84 : f32 to vector<8x128xf32>
    %213 = arith.mulf %212, %211 : vector<8x128xf32>
    %cst_85 = arith.constant 5.000000e-01 : f32
    %214 = vector.broadcast %cst_85 : f32 to vector<8x128xf32>
    %215 = arith.addf %213, %214 : vector<8x128xf32>
    %216 = vector.extract_strided_slice %199 {offsets = [0, 256], sizes = [8, 128], strides = [1, 1]} : vector<8x512xf32> to vector<8x128xf32>
    %217 = math.tanh %216 : vector<8x128xf32>
    %218 = vector.extract_strided_slice %199 {offsets = [0, 384], sizes = [8, 128], strides = [1, 1]} : vector<8x512xf32> to vector<8x128xf32>
    %cst_86 = arith.constant 5.000000e-01 : f32
    %219 = vector.broadcast %cst_86 : f32 to vector<8x128xf32>
    %220 = arith.mulf %219, %218 : vector<8x128xf32>
    %221 = math.tanh %220 : vector<8x128xf32>
    %cst_87 = arith.constant 5.000000e-01 : f32
    %222 = vector.broadcast %cst_87 : f32 to vector<8x128xf32>
    %223 = arith.mulf %222, %221 : vector<8x128xf32>
    %cst_88 = arith.constant 5.000000e-01 : f32
    %224 = vector.broadcast %cst_88 : f32 to vector<8x128xf32>
    %225 = arith.addf %223, %224 : vector<8x128xf32>
    %226 = arith.mulf %215, %192 : vector<8x128xf32>
    %227 = arith.mulf %207, %217 : vector<8x128xf32>
    %228 = arith.addf %226, %227 : vector<8x128xf32>
    %229 = math.tanh %228 : vector<8x128xf32>
    %230 = arith.mulf %225, %229 : vector<8x128xf32>
    %c6_i32 = arith.constant 6 : i32
    %231 = arith.index_cast %c6_i32 : i32 to index
    %c0_89 = arith.constant 0 : index
    %c0_90 = arith.constant 0 : index
    %232 = vector.load %arg11[%231, %c0_89, %c0_90] : memref<8x8x512xf32, #tpu.memory_space<vmem>>, vector<1x8x512xf32>
    %233 = vector.shape_cast %232 : vector<1x8x512xf32> to vector<8x512xf32>
    %cst_91 = arith.constant dense<0.000000e+00> : vector<8x512xf32>
    %234 = tpu.matmul %230, %12, %cst_91 {dimension_numbers = #tpu.dot_dimension_numbers<[1], [0], [0], [1], [0, 0, 1, 1], [], []>} : vector<8x128xf32>, vector<128x512xf32>, vector<8x512xf32> -> vector<8x512xf32>
    %235 = arith.addf %233, %234 : vector<8x512xf32>
    %236 = vector.extract_strided_slice %235 {offsets = [0, 0], sizes = [8, 128], strides = [1, 1]} : vector<8x512xf32> to vector<8x128xf32>
    %cst_92 = arith.constant 5.000000e-01 : f32
    %237 = vector.broadcast %cst_92 : f32 to vector<8x128xf32>
    %238 = arith.mulf %237, %236 : vector<8x128xf32>
    %239 = math.tanh %238 : vector<8x128xf32>
    %cst_93 = arith.constant 5.000000e-01 : f32
    %240 = vector.broadcast %cst_93 : f32 to vector<8x128xf32>
    %241 = arith.mulf %240, %239 : vector<8x128xf32>
    %cst_94 = arith.constant 5.000000e-01 : f32
    %242 = vector.broadcast %cst_94 : f32 to vector<8x128xf32>
    %243 = arith.addf %241, %242 : vector<8x128xf32>
    %244 = vector.extract_strided_slice %235 {offsets = [0, 128], sizes = [8, 128], strides = [1, 1]} : vector<8x512xf32> to vector<8x128xf32>
    %cst_95 = arith.constant 5.000000e-01 : f32
    %245 = vector.broadcast %cst_95 : f32 to vector<8x128xf32>
    %246 = arith.mulf %245, %244 : vector<8x128xf32>
    %247 = math.tanh %246 : vector<8x128xf32>
    %cst_96 = arith.constant 5.000000e-01 : f32
    %248 = vector.broadcast %cst_96 : f32 to vector<8x128xf32>
    %249 = arith.mulf %248, %247 : vector<8x128xf32>
    %cst_97 = arith.constant 5.000000e-01 : f32
    %250 = vector.broadcast %cst_97 : f32 to vector<8x128xf32>
    %251 = arith.addf %249, %250 : vector<8x128xf32>
    %252 = vector.extract_strided_slice %235 {offsets = [0, 256], sizes = [8, 128], strides = [1, 1]} : vector<8x512xf32> to vector<8x128xf32>
    %253 = math.tanh %252 : vector<8x128xf32>
    %254 = vector.extract_strided_slice %235 {offsets = [0, 384], sizes = [8, 128], strides = [1, 1]} : vector<8x512xf32> to vector<8x128xf32>
    %cst_98 = arith.constant 5.000000e-01 : f32
    %255 = vector.broadcast %cst_98 : f32 to vector<8x128xf32>
    %256 = arith.mulf %255, %254 : vector<8x128xf32>
    %257 = math.tanh %256 : vector<8x128xf32>
    %cst_99 = arith.constant 5.000000e-01 : f32
    %258 = vector.broadcast %cst_99 : f32 to vector<8x128xf32>
    %259 = arith.mulf %258, %257 : vector<8x128xf32>
    %cst_100 = arith.constant 5.000000e-01 : f32
    %260 = vector.broadcast %cst_100 : f32 to vector<8x128xf32>
    %261 = arith.addf %259, %260 : vector<8x128xf32>
    %262 = arith.mulf %251, %228 : vector<8x128xf32>
    %263 = arith.mulf %243, %253 : vector<8x128xf32>
    %264 = arith.addf %262, %263 : vector<8x128xf32>
    %265 = math.tanh %264 : vector<8x128xf32>
    %266 = arith.mulf %261, %265 : vector<8x128xf32>
    %c7_i32 = arith.constant 7 : i32
    %267 = arith.index_cast %c7_i32 : i32 to index
    %c0_101 = arith.constant 0 : index
    %c0_102 = arith.constant 0 : index
    %268 = vector.load %arg11[%267, %c0_101, %c0_102] : memref<8x8x512xf32, #tpu.memory_space<vmem>>, vector<1x8x512xf32>
    %269 = vector.shape_cast %268 : vector<1x8x512xf32> to vector<8x512xf32>
    %cst_103 = arith.constant dense<0.000000e+00> : vector<8x512xf32>
    %270 = tpu.matmul %266, %12, %cst_103 {dimension_numbers = #tpu.dot_dimension_numbers<[1], [0], [0], [1], [0, 0, 1, 1], [], []>} : vector<8x128xf32>, vector<128x512xf32>, vector<8x512xf32> -> vector<8x512xf32>
    %271 = arith.addf %269, %270 : vector<8x512xf32>
    %272 = vector.extract_strided_slice %271 {offsets = [0, 0], sizes = [8, 128], strides = [1, 1]} : vector<8x512xf32> to vector<8x128xf32>
    %cst_104 = arith.constant 5.000000e-01 : f32
    %273 = vector.broadcast %cst_104 : f32 to vector<8x128xf32>
    %274 = arith.mulf %273, %272 : vector<8x128xf32>
    %275 = math.tanh %274 : vector<8x128xf32>
    %cst_105 = arith.constant 5.000000e-01 : f32
    %276 = vector.broadcast %cst_105 : f32 to vector<8x128xf32>
    %277 = arith.mulf %276, %275 : vector<8x128xf32>
    %cst_106 = arith.constant 5.000000e-01 : f32
    %278 = vector.broadcast %cst_106 : f32 to vector<8x128xf32>
    %279 = arith.addf %277, %278 : vector<8x128xf32>
    %280 = vector.extract_strided_slice %271 {offsets = [0, 128], sizes = [8, 128], strides = [1, 1]} : vector<8x512xf32> to vector<8x128xf32>
    %cst_107 = arith.constant 5.000000e-01 : f32
    %281 = vector.broadcast %cst_107 : f32 to vector<8x128xf32>
    %282 = arith.mulf %281, %280 : vector<8x128xf32>
    %283 = math.tanh %282 : vector<8x128xf32>
    %cst_108 = arith.constant 5.000000e-01 : f32
    %284 = vector.broadcast %cst_108 : f32 to vector<8x128xf32>
    %285 = arith.mulf %284, %283 : vector<8x128xf32>
    %cst_109 = arith.constant 5.000000e-01 : f32
    %286 = vector.broadcast %cst_109 : f32 to vector<8x128xf32>
    %287 = arith.addf %285, %286 : vector<8x128xf32>
    %288 = vector.extract_strided_slice %271 {offsets = [0, 256], sizes = [8, 128], strides = [1, 1]} : vector<8x512xf32> to vector<8x128xf32>
    %289 = math.tanh %288 : vector<8x128xf32>
    %290 = vector.extract_strided_slice %271 {offsets = [0, 384], sizes = [8, 128], strides = [1, 1]} : vector<8x512xf32> to vector<8x128xf32>
    %cst_110 = arith.constant 5.000000e-01 : f32
    %291 = vector.broadcast %cst_110 : f32 to vector<8x128xf32>
    %292 = arith.mulf %291, %290 : vector<8x128xf32>
    %293 = math.tanh %292 : vector<8x128xf32>
    %cst_111 = arith.constant 5.000000e-01 : f32
    %294 = vector.broadcast %cst_111 : f32 to vector<8x128xf32>
    %295 = arith.mulf %294, %293 : vector<8x128xf32>
    %cst_112 = arith.constant 5.000000e-01 : f32
    %296 = vector.broadcast %cst_112 : f32 to vector<8x128xf32>
    %297 = arith.addf %295, %296 : vector<8x128xf32>
    %298 = arith.mulf %287, %264 : vector<8x128xf32>
    %299 = arith.mulf %279, %289 : vector<8x128xf32>
    %300 = arith.addf %298, %299 : vector<8x128xf32>
    %301 = math.tanh %300 : vector<8x128xf32>
    %302 = arith.mulf %297, %301 : vector<8x128xf32>
    %c8_i32 = arith.constant 8 : i32
    %c0_113 = arith.constant 0 : index
    %c0_114 = arith.constant 0 : index
    %303 = vector.load %arg9[%c0_113, %c0_114] : memref<8x128xf32, #tpu.memory_space<vmem>>, vector<8x128xf32>
    tpu.vector_store %arg9[%c0_113, %c0_114], %302 {strides = array<i32>} : memref<8x128xf32, #tpu.memory_space<vmem>>, vector<8x128xf32>,
    %c0_115 = arith.constant 0 : index
    %c0_116 = arith.constant 0 : index
    %304 = vector.load %arg10[%c0_115, %c0_116] : memref<8x128xf32, #tpu.memory_space<vmem>>, vector<8x128xf32>
    tpu.vector_store %arg10[%c0_115, %c0_116], %300 {strides = array<i32>} : memref<8x128xf32, #tpu.memory_space<vmem>>, vector<8x128xf32>,
    %c0_i32_117 = arith.constant 0 : i32
    %305 = arith.cmpi eq, %arg1, %c0_i32_117 : i32
    %306 = arith.extui %305 : i1 to i32
    %c0_i32_118 = arith.constant 0 : i32
    %307 = arith.cmpi ne, %306, %c0_i32_118 : i32
    scf.if %307 {
      %c0_119 = arith.constant 0 : index
      %c0_120 = arith.constant 0 : index
      %308 = vector.load %arg6[%c0_119, %c0_120] : memref<128x128xf32, #tpu.memory_space<vmem>>, vector<128x128xf32>
      %cst_121 = arith.constant dense<0.000000e+00> : vector<8x128xf32>
      %309 = tpu.matmul %302, %308, %cst_121 {dimension_numbers = #tpu.dot_dimension_numbers<[1], [0], [0], [1], [0, 0, 1, 1], [], []>} : vector<8x128xf32>, vector<128x128xf32>, vector<8x128xf32> -> vector<8x128xf32>
      %c0_122 = arith.constant 0 : index
      %c0_123 = arith.constant 0 : index
      %310 = vector.load %arg7[%c0_122, %c0_123] : memref<1x128xf32, #tpu.memory_space<vmem>>, vector<1x128xf32>
      %311 = vector.broadcast %310 : vector<1x128xf32> to vector<8x128xf32>
      %312 = arith.addf %309, %311 : vector<8x128xf32>
      %c0_124 = arith.constant 0 : index
      %c0_125 = arith.constant 0 : index
      %313 = vector.load %arg8[%c0_124, %c0_125] : memref<8x128xf32, #tpu.memory_space<vmem>>, vector<8x128xf32>
      tpu.vector_store %arg8[%c0_124, %c0_125], %312 {strides = array<i32>} : memref<8x128xf32, #tpu.memory_space<vmem>>, vector<8x128xf32>,
    } else {
    }
    return
  }
  func.func @transform_0(%arg0: i32, %arg1: i32) -> (i32, i32, i32) {
    %c0_i32 = arith.constant 0 : i32
    %c0_i32_0 = arith.constant 0 : i32
    return %arg1, %arg0, %c0_i32 : i32, i32, i32
  }
  func.func @transform_1(%arg0: i32, %arg1: i32) -> (i32, i32) {
    %c0_i32 = arith.constant 0 : i32
    %c0_i32_0 = arith.constant 0 : i32
    %c0_i32_1 = arith.constant 0 : i32
    return %c0_i32, %c0_i32_0 : i32, i32
  }
  func.func @transform_2(%arg0: i32, %arg1: i32) -> (i32, i32) {
    %c0_i32 = arith.constant 0 : i32
    %c0_i32_0 = arith.constant 0 : i32
    %c0_i32_1 = arith.constant 0 : i32
    return %c0_i32, %c0_i32_0 : i32, i32
  }
  func.func @transform_3(%arg0: i32, %arg1: i32) -> (i32, i32) {
    %c0_i32 = arith.constant 0 : i32
    %c0_i32_0 = arith.constant 0 : i32
    %c0_i32_1 = arith.constant 0 : i32
    return %c0_i32, %c0_i32_0 : i32, i32
  }
  func.func @transform_4(%arg0: i32, %arg1: i32) -> (i32, i32) {
    %c0_i32 = arith.constant 0 : i32
    %c0_i32_0 = arith.constant 0 : i32
    %c0_i32_1 = arith.constant 0 : i32
    return %c0_i32, %c0_i32_0 : i32, i32
  }
  func.func @transform_5(%arg0: i32, %arg1: i32) -> (i32, i32) {
    %c0_i32 = arith.constant 0 : i32
    %c0_i32_0 = arith.constant 0 : i32
    %c0_i32_1 = arith.constant 0 : i32
    return %c0_i32, %c0_i32_0 : i32, i32
  }
  func.func @transform_6(%arg0: i32, %arg1: i32) -> (i32, i32) {
    %c0_i32 = arith.constant 0 : i32
    %c0_i32_0 = arith.constant 0 : i32
    return %arg0, %c0_i32 : i32, i32
  }
}

</mosaic_0001>

<llo_original>
// kernel: tpu_custom_call.1
$region0: #{tpu_custom_call.1}
  #allocation0 [shape = 'u32[]', space=smem, size = 0x4, offset = 0x4, fixed_abs, tag = 'smem constant byte address 0x4 - core index']
  #allocation1 [shape = 'u32[72,128]{1,0:T(1,128)}', space=vmem, size = 0x9000, scoped, tag = 'internal scratch']
  #allocation2 [shape = 'f32[8,128]{1,0:T(8,128)}', space=vmem, size = 0x1000, scoped, tag = 'scratch operand']
  #allocation3 [shape = 'f32[8,128]{1,0:T(8,128)}', space=vmem, size = 0x1000, scoped, tag = 'scratch operand']
  #allocation4 [shape = 'f32[8,8,512]{2,1,0:T(8,128)}', space=vmem, size = 0x20000, scoped, tag = 'scratch operand']
  %s0 = inlined_call_operand.hbm [shape: f32[8,8,16], index: 0, kind: input, shape index: {}]
  %s1 = inlined_call_operand.hbm [shape: f32[16,512], index: 1, kind: input, shape index: {}]
  %s2 = inlined_call_operand.hbm [shape: f32[1,512], index: 2, kind: input, shape index: {}]
  %s3 = inlined_call_operand.hbm [shape: f32[128,512], index: 3, kind: input, shape index: {}]
  %s4 = inlined_call_operand.hbm [shape: f32[128,128], index: 4, kind: input, shape index: {}]
  %s5 = inlined_call_operand.vmem [shape: f32[1,128], index: 5, kind: input, shape index: {}]
  %s6 = inlined_call_operand.hbm [shape: f32[8,128], index: 6, kind: output, shape index: {}]
  %s7 = sld [smem:[#allocation0]]
  $region62: #{tpu_custom_call.1} parent=0
    _
  %s9 = ssub.s32 1, %s7
  %s10 = scalar_select 0, %s9, %s7
  $region1: #{tpu_custom_call.1} parent=0
    #allocation5 [shape = 'u8[32768]{0}', space=vmem, size = 0x8000, scoped, tag = 'input window, operand 0, single buffered']
    #allocation6 [shape = 's32[1]{0}', space=sflag, size = 0x4, scoped, tag = 'scoped memory for tpu_custom_call.1']
    #allocation7 [shape = 's32[1]{0}', space=sflag, size = 0x4, scoped, tag = 'scoped memory for tpu_custom_call.1']
    #allocation8 [shape = 'u8[32768]{0}', space=vmem, size = 0x8000, scoped, tag = 'input window, operand 1, single buffered']
    #allocation9 [shape = 's32[1]{0}', space=sflag, size = 0x4, scoped, tag = 'scoped memory for tpu_custom_call.1']
    #allocation10 [shape = 'u8[2048]{0}', space=vmem, size = 0x800, scoped, tag = 'input window, operand 2, single buffered']
    #allocation11 [shape = 'u8[262144]{0}', space=vmem, size = 0x40000, scoped, tag = 'input window, operand 3, single buffered']
    #allocation12 [shape = 's32[1]{0}', space=sflag, size = 0x4, scoped, tag = 'scoped memory for tpu_custom_call.1']
    #allocation13 [shape = 'u8[65536]{0}', space=vmem, size = 0x10000, scoped, tag = 'input window, operand 4, single buffered']
    #allocation14 [shape = 'u8[4096]{0}', space=vmem, size = 0x1000, scoped, tag = 'output window, operand 0, single buffered']
    %11 = vsyncpa [#allocation6], 0
    %12 = vsyncpa [#allocation9], 0
    %13 = vsyncpa [#allocation12], 0
    %14 = vsyncpa [#allocation7], 0
    // Predicated region
    $region2: #{tpu_custom_call.1} parent=1 // pred_check
      _
    $region3: #{tpu_custom_call.1} parent=1 // pred_check_branch
      %16 = sbr.rel (0) target = $region5
    $region4: #{tpu_custom_call.1} parent=1 // pred_region
      %18 = vsyncadd [#allocation6], 0
      %s19 = sshll.u32 %s0, 4
      %s20 = int_to_ptr.hbm [resolvable:$true] %s19
      %s21 = sshll.u32 [#allocation5], 4
      %s22 = int_to_ptr.vmem [resolvable:$true] %s21
      %27 = dma.hbm_to_vmem [thread:$0]  %s20, 1024, %s22, [#allocation6], 128, 128, 8
    $region5: #{tpu_custom_call.1} parent=1 // pred_fallthru
      _
    // Predicated region
    $region6: #{tpu_custom_call.1} parent=1 // pred_check
      _
    $region7: #{tpu_custom_call.1} parent=1 // pred_check_branch
      %29 = sbr.rel (0) target = $region9
    $region8: #{tpu_custom_call.1} parent=1 // pred_region
      %31 = vsyncadd [#allocation9], 0
      %s32 = sshll.u32 %s1, 4
      %s33 = int_to_ptr.hbm [resolvable:$true] %s32
      %s34 = sshll.u32 [#allocation8], 4
      %s35 = int_to_ptr.vmem [resolvable:$true] %s34
      %40 = dma.hbm_to_vmem [thread:$0]  %s33, 1024, %s35, [#allocation9], 512, 512, 32
    $region9: #{tpu_custom_call.1} parent=1 // pred_fallthru
      _
    // Predicated region
    $region10: #{tpu_custom_call.1} parent=1 // pred_check
      _
    $region11: #{tpu_custom_call.1} parent=1 // pred_check_branch
      %42 = sbr.rel (0) target = $region13
    $region12: #{tpu_custom_call.1} parent=1 // pred_region
      %44 = vsyncadd [#allocation9], 0
      %s46 = sshll.u32 %s2, 4
      %s47 = int_to_ptr.hbm [resolvable:$true] %s46
      %s48 = sshll.u32 [#allocation10], 4
      %s49 = int_to_ptr.vmem [resolvable:$true] %s48
      %51 = dma.hbm_to_vmem [thread:$0]  %s47, 64, %s49, [#allocation9]
    $region13: #{tpu_custom_call.1} parent=1 // pred_fallthru
      _
    // Predicated region
    $region14: #{tpu_custom_call.1} parent=1 // pred_check
      _
    $region15: #{tpu_custom_call.1} parent=1 // pred_check_branch
      %53 = sbr.rel (0) target = $region17
    $region16: #{tpu_custom_call.1} parent=1 // pred_region
      %55 = vsyncadd [#allocation12], 0
      %s56 = sshll.u32 %s3, 4
      %s57 = int_to_ptr.hbm [resolvable:$true] %s56
      %s58 = sshll.u32 [#allocation11], 4
      %s59 = int_to_ptr.vmem [resolvable:$true] %s58
      %64 = dma.hbm_to_vmem [thread:$0]  %s57, 8192, %s59, [#allocation12], 512, 512, 32
    $region17: #{tpu_custom_call.1} parent=1 // pred_fallthru
      _
    // Predicated region
    $region18: #{tpu_custom_call.1} parent=1 // pred_check
      _
    $region19: #{tpu_custom_call.1} parent=1 // pred_check_branch
      %66 = sbr.rel (0) target = $region21
    $region20: #{tpu_custom_call.1} parent=1 // pred_region
      %68 = vsyncadd [#allocation12], 0
      %s69 = sshll.u32 %s4, 4
      %s70 = int_to_ptr.hbm [resolvable:$true] %s69
      %s71 = sshll.u32 [#allocation13], 4
      %s72 = int_to_ptr.vmem [resolvable:$true] %s71
      %77 = dma.hbm_to_vmem [thread:$0]  %s70, 2048, %s72, [#allocation12], 128, 128, 8
    $region21: #{tpu_custom_call.1} parent=1 // pred_fallthru
      _
    // Predicated region
    $region22: #{tpu_custom_call.1} parent=1 // pred_check
      _
    $region23: #{tpu_custom_call.1} parent=1 // pred_check_branch
      %79 = sbr.rel (0) target = $region25
    $region24: #{tpu_custom_call.1} parent=1 // pred_region
      _
    $region25: #{tpu_custom_call.1} parent=1 // pred_fallthru
      _
    // Predicated region
    $region26: #{tpu_custom_call.1} parent=1 // pred_check
      _
    $region27: #{tpu_custom_call.1} parent=1 // pred_check_branch
      %81 = sbr.rel (0) target = $region29
    $region28: #{tpu_custom_call.1} parent=1 // pred_region
      %83 = dma.done [#allocation6], 1024
    $region29: #{tpu_custom_call.1} parent=1 // pred_fallthru
      _
    // Predicated region
    $region30: #{tpu_custom_call.1} parent=1 // pred_check
      _
    $region31: #{tpu_custom_call.1} parent=1 // pred_check_branch
      %85 = sbr.rel (0) target = $region33
    $region32: #{tpu_custom_call.1} parent=1 // pred_region
      %87 = dma.done [#allocation9], 1024
    $region33: #{tpu_custom_call.1} parent=1 // pred_fallthru
      _
    // Predicated region
    $region34: #{tpu_custom_call.1} parent=1 // pred_check
      _
    $region35: #{tpu_custom_call.1} parent=1 // pred_check_branch
      %89 = sbr.rel (0) target = $region37
    $region36: #{tpu_custom_call.1} parent=1 // pred_region
      %91 = dma.done [#allocation9], 64
    $region37: #{tpu_custom_call.1} parent=1 // pred_fallthru
      _
    // Predicated region
    $region38: #{tpu_custom_call.1} parent=1 // pred_check
      _
    $region39: #{tpu_custom_call.1} parent=1 // pred_check_branch
      %93 = sbr.rel (0) target = $region41
    $region40: #{tpu_custom_call.1} parent=1 // pred_region
      %95 = dma.done [#allocation12], 8192
    $region41: #{tpu_custom_call.1} parent=1 // pred_fallthru
      _
    // Predicated region
    $region42: #{tpu_custom_call.1} parent=1 // pred_check
      _
    $region43: #{tpu_custom_call.1} parent=1 // pred_check_branch
      %97 = sbr.rel (0) target = $region45
    $region44: #{tpu_custom_call.1} parent=1 // pred_region
      %99 = dma.done [#allocation12], 2048
    $region45: #{tpu_custom_call.1} parent=1 // pred_fallthru
      _
    %p100 = scmp.eq.s32.totalorder 0, 0
    // Predicated region
    $region46: #{tpu_custom_call.1} parent=1 // pred_check
      %p101 = pneg %p100
    $region47: #{tpu_custom_call.1} parent=1 // pred_check_branch
      %103 = sbr.rel (%p101) target = $region49
    $region48: #{tpu_custom_call.1} parent=1 // pred_region
      %104 = vst [vmem:[#allocation2] sm:$0xff] 0.0
      %105 = vst [vmem:[#allocation3] sm:$0xff] 0.0
    $region49: #{tpu_custom_call.1} parent=1 // pred_fallthru
      _
    %v106 = vld [vmem:[#allocation5] sm:$0xff]
    %v107 = vld [vmem:[#allocation5 + $0x8] sm:$0xff]
    %v108 = vld [vmem:[#allocation5 + $0x10] sm:$0xff]
    %v109 = vld [vmem:[#allocation5 + $0x18] sm:$0xff]
    %v110 = vld [vmem:[#allocation5 + $0x20] sm:$0xff]
    %v111 = vld [vmem:[#allocation5 + $0x28] sm:$0xff]
    %v112 = vld [vmem:[#allocation5 + $0x30] sm:$0xff]
    %v113 = vld [vmem:[#allocation5 + $0x38] sm:$0xff]
    %v114 = vld [vmem:[#allocation8] sm:$0xff]
    %v115 = vld [vmem:[#allocation8 + $0x8] sm:$0xff]
    %v116 = vld [vmem:[#allocation8 + $0x10] sm:$0xff]
    %v117 = vld [vmem:[#allocation8 + $0x18] sm:$0xff]
    %v118 = vld [vmem:[#allocation8 + $0x20] sm:$0xff]
    %v119 = vld [vmem:[#allocation8 + $0x28] sm:$0xff]
    %v120 = vld [vmem:[#allocation8 + $0x30] sm:$0xff]
    %v121 = vld [vmem:[#allocation8 + $0x38] sm:$0xff]
    %v122 = vld [vmem:[#allocation10] sm:$0xf]
    %v124 = vperm.slane %v122, 0
    %v125 = vperm.slane %v122, 1
    %v126 = vperm.slane %v122, 2
    %v127 = vperm.slane %v122, 3
    %vm132 = vcmask 130048
    %v134 = vsel %vm132, %v106, 0
    %v137 = vsel %vm132, %v107, 0
    %v140 = vsel %vm132, %v108, 0
    %v143 = vsel %vm132, %v109, 0
    %v146 = vsel %vm132, %v110, 0
    %v149 = vsel %vm132, %v111, 0
    %v152 = vsel %vm132, %v112, 0
    %v155 = vsel %vm132, %v113, 0
    %157 = vmatpush.msra.mxu0 0.0
    %158 = vmatpush.msra.mxu0 0.0
    %159 = vmatpush.msra.mxu0 0.0
    %160 = vmatpush.msra.mxu0 0.0
    %161 = vmatpush.msra.mxu0 0.0
    %162 = vmatpush.msra.mxu0 0.0
    %163 = vmatpush.msra.mxu0 0.0
    %164 = vmatpush.msra.mxu0 0.0
    %165 = vmatpush.msra.mxu0 0.0
    %166 = vmatpush.msra.mxu0 0.0
    %167 = vmatpush.msra.mxu0 0.0
    %168 = vmatpush.msra.mxu0 0.0
    %169 = vmatpush.msra.mxu0 0.0
    %170 = vmatpush.msra.mxu0 0.0
    %171 = vmatpush.msra.mxu0 %v118
    %172 = vmatpush.msra.mxu0 %v114
    %173 = vmatmul.f32.gmra.mxu0 %v134
    %v174 = vpop.f32.mrf.mxu0
    %v175 = vadd.f32 %v124, %v174
    %176 = vmatmul.f32.gmra.mxu0 %v137
    %v177 = vpop.f32.mrf.mxu0
    %v178 = vadd.f32 %v124, %v177
    %179 = vmatmul.f32.gmra.mxu0 %v140
    %v180 = vpop.f32.mrf.mxu0
    %v181 = vadd.f32 %v124, %v180
    %182 = vmatmul.f32.gmra.mxu0 %v143
    %v183 = vpop.f32.mrf.mxu0
    %v184 = vadd.f32 %v124, %v183
    %185 = vmatmul.f32.gmra.mxu0 %v146
    %v186 = vpop.f32.mrf.mxu0
    %v187 = vadd.f32 %v124, %v186
    %188 = vmatmul.f32.gmra.mxu0 %v149
    %v189 = vpop.f32.mrf.mxu0
    %v190 = vadd.f32 %v124, %v189
    %191 = vmatmul.f32.gmra.mxu0 %v152
    %v192 = vpop.f32.mrf.mxu0
    %v193 = vadd.f32 %v124, %v192
    %194 = vmatmul.f32.gmra.mxu0 %v155
    %v195 = vpop.f32.mrf.mxu0
    %v196 = vadd.f32 %v124, %v195
    %197 = vdwg.mxu0
    %198 = vmatpush.msra.mxu0 0.0
    %199 = vmatpush.msra.mxu0 0.0
    %200 = vmatpush.msra.mxu0 0.0
    %201 = vmatpush.msra.mxu0 0.0
    %202 = vmatpush.msra.mxu0 0.0
    %203 = vmatpush.msra.mxu0 0.0
    %204 = vmatpush.msra.mxu0 0.0
    %205 = vmatpush.msra.mxu0 0.0
    %206 = vmatpush.msra.mxu0 0.0
    %207 = vmatpush.msra.mxu0 0.0
    %208 = vmatpush.msra.mxu0 0.0
    %209 = vmatpush.msra.mxu0 0.0
    %210 = vmatpush.msra.mxu0 0.0
    %211 = vmatpush.msra.mxu0 0.0
    %212 = vmatpush.msra.mxu0 %v119
    %213 = vmatpush.msra.mxu0 %v115
    %214 = vmatmul.f32.gmra.mxu0 %v134
    %v215 = vpop.f32.mrf.mxu0
    %v216 = vadd.f32 %v125, %v215
    %217 = vmatmul.f32.gmra.mxu0 %v137
    %v218 = vpop.f32.mrf.mxu0
    %v219 = vadd.f32 %v125, %v218
    %220 = vmatmul.f32.gmra.mxu0 %v140
    %v221 = vpop.f32.mrf.mxu0
    %v222 = vadd.f32 %v125, %v221
    %223 = vmatmul.f32.gmra.mxu0 %v143
    %v224 = vpop.f32.mrf.mxu0
    %v225 = vadd.f32 %v125, %v224
    %226 = vmatmul.f32.gmra.mxu0 %v146
    %v227 = vpop.f32.mrf.mxu0
    %v228 = vadd.f32 %v125, %v227
    %229 = vmatmul.f32.gmra.mxu0 %v149
    %v230 = vpop.f32.mrf.mxu0
    %v231 = vadd.f32 %v125, %v230
    %232 = vmatmul.f32.gmra.mxu0 %v152
    %v233 = vpop.f32.mrf.mxu0
    %v234 = vadd.f32 %v125, %v233
    %235 = vmatmul.f32.gmra.mxu0 %v155
    %v236 = vpop.f32.mrf.mxu0
    %v237 = vadd.f32 %v125, %v236
    %238 = vdwg.mxu0
    %239 = vmatpush.msra.mxu0 0.0
    %240 = vmatpush.msra.mxu0 0.0
    %241 = vmatpush.msra.mxu0 0.0
    %242 = vmatpush.msra.mxu0 0.0
    %243 = vmatpush.msra.mxu0 0.0
    %244 = vmatpush.msra.mxu0 0.0
    %245 = vmatpush.msra.mxu0 0.0
    %246 = vmatpush.msra.mxu0 0.0
    %247 = vmatpush.msra.mxu0 0.0
    %248 = vmatpush.msra.mxu0 0.0
    %249 = vmatpush.msra.mxu0 0.0
    %250 = vmatpush.msra.mxu0 0.0
    %251 = vmatpush.msra.mxu0 0.0
    %252 = vmatpush.msra.mxu0 0.0
    %253 = vmatpush.msra.mxu0 %v120
    %254 = vmatpush.msra.mxu0 %v116
    %255 = vmatmul.f32.gmra.mxu0 %v134
    %v256 = vpop.f32.mrf.mxu0
    %v257 = vadd.f32 %v126, %v256
    %258 = vmatmul.f32.gmra.mxu0 %v137
    %v259 = vpop.f32.mrf.mxu0
    %v260 = vadd.f32 %v126, %v259
    %261 = vmatmul.f32.gmra.mxu0 %v140
    %v262 = vpop.f32.mrf.mxu0
    %v263 = vadd.f32 %v126, %v262
    %264 = vmatmul.f32.gmra.mxu0 %v143
    %v265 = vpop.f32.mrf.mxu0
    %v266 = vadd.f32 %v126, %v265
    %267 = vmatmul.f32.gmra.mxu0 %v146
    %v268 = vpop.f32.mrf.mxu0
    %v269 = vadd.f32 %v126, %v268
    %270 = vmatmul.f32.gmra.mxu0 %v149
    %v271 = vpop.f32.mrf.mxu0
    %v272 = vadd.f32 %v126, %v271
    %273 = vmatmul.f32.gmra.mxu0 %v152
    %v274 = vpop.f32.mrf.mxu0
    %v275 = vadd.f32 %v126, %v274
    %276 = vmatmul.f32.gmra.mxu0 %v155
    %v277 = vpop.f32.mrf.mxu0
    %v278 = vadd.f32 %v126, %v277
    %279 = vdwg.mxu0
    %280 = vmatpush.msra.mxu0 0.0
    %281 = vmatpush.msra.mxu0 0.0
    %282 = vmatpush.msra.mxu0 0.0
    %283 = vmatpush.msra.mxu0 0.0
    %284 = vmatpush.msra.mxu0 0.0
    %285 = vmatpush.msra.mxu0 0.0
    %286 = vmatpush.msra.mxu0 0.0
    %287 = vmatpush.msra.mxu0 0.0
    %288 = vmatpush.msra.mxu0 0.0
    %289 = vmatpush.msra.mxu0 0.0
    %290 = vmatpush.msra.mxu0 0.0
    %291 = vmatpush.msra.mxu0 0.0
    %292 = vmatpush.msra.mxu0 0.0
    %293 = vmatpush.msra.mxu0 0.0
    %294 = vmatpush.msra.mxu0 %v121
    %295 = vmatpush.msra.mxu0 %v117
    %296 = vmatmul.f32.gmra.mxu0 %v134
    %v297 = vpop.f32.mrf.mxu0
    %v298 = vadd.f32 %v127, %v297
    %299 = vmatmul.f32.gmra.mxu0 %v137
    %v300 = vpop.f32.mrf.mxu0
    %v301 = vadd.f32 %v127, %v300
    %302 = vmatmul.f32.gmra.mxu0 %v140
    %v303 = vpop.f32.mrf.mxu0
    %v304 = vadd.f32 %v127, %v303
    %305 = vmatmul.f32.gmra.mxu0 %v143
    %v306 = vpop.f32.mrf.mxu0
    %v307 = vadd.f32 %v127, %v306
    %308 = vmatmul.f32.gmra.mxu0 %v146
    %v309 = vpop.f32.mrf.mxu0
    %v310 = vadd.f32 %v127, %v309
    %311 = vmatmul.f32.gmra.mxu0 %v149
    %v312 = vpop.f32.mrf.mxu0
    %v313 = vadd.f32 %v127, %v312
    %314 = vmatmul.f32.gmra.mxu0 %v152
    %v315 = vpop.f32.mrf.mxu0
    %v316 = vadd.f32 %v127, %v315
    %317 = vmatmul.f32.gmra.mxu0 %v155
    %v318 = vpop.f32.mrf.mxu0
    %v319 = vadd.f32 %v127, %v318
    %320 = vdwg.mxu0
    %321 = vst [vmem:[#allocation4] sm:$0xff] %v175
    %322 = vst [vmem:[#allocation4 + $0x8] sm:$0xff] %v216
    %323 = vst [vmem:[#allocation4 + $0x10] sm:$0xff] %v257
    %324 = vst [vmem:[#allocation4 + $0x18] sm:$0xff] %v298
    %325 = vst [vmem:[#allocation4 + $0x20] sm:$0xff] %v178
    %326 = vst [vmem:[#allocation4 + $0x28] sm:$0xff] %v219
    %327 = vst [vmem:[#allocation4 + $0x30] sm:$0xff] %v260
    %328 = vst [vmem:[#allocation4 + $0x38] sm:$0xff] %v301
    %329 = vst [vmem:[#allocation4 + $0x40] sm:$0xff] %v181
    %330 = vst [vmem:[#allocation4 + $0x48] sm:$0xff] %v222
    %331 = vst [vmem:[#allocation4 + $0x50] sm:$0xff] %v263
    %332 = vst [vmem:[#allocation4 + $0x58] sm:$0xff] %v304
    %333 = vst [vmem:[#allocation4 + $0x60] sm:$0xff] %v184
    %334 = vst [vmem:[#allocation4 + $0x68] sm:$0xff] %v225
    %335 = vst [vmem:[#allocation4 + $0x70] sm:$0xff] %v266
    %336 = vst [vmem:[#allocation4 + $0x78] sm:$0xff] %v307
    %337 = vst [vmem:[#allocation4 + $0x80] sm:$0xff] %v187
    %338 = vst [vmem:[#allocation4 + $0x88] sm:$0xff] %v228
    %339 = vst [vmem:[#allocation4 + $0x90] sm:$0xff] %v269
    %340 = vst [vmem:[#allocation4 + $0x98] sm:$0xff] %v310
    %341 = vst [vmem:[#allocation4 + $0xa0] sm:$0xff] %v190
    %342 = vst [vmem:[#allocation4 + $0xa8] sm:$0xff] %v231
    %343 = vst [vmem:[#allocation4 + $0xb0] sm:$0xff] %v272
    %344 = vst [vmem:[#allocation4 + $0xb8] sm:$0xff] %v313
    %345 = vst [vmem:[#allocation4 + $0xc0] sm:$0xff] %v193
    %346 = vst [vmem:[#allocation4 + $0xc8] sm:$0xff] %v234
    %347 = vst [vmem:[#allocation4 + $0xd0] sm:$0xff] %v275
    %348 = vst [vmem:[#allocation4 + $0xd8] sm:$0xff] %v316
    %349 = vst [vmem:[#allocation4 + $0xe0] sm:$0xff] %v196
    %350 = vst [vmem:[#allocation4 + $0xe8] sm:$0xff] %v237
    %351 = vst [vmem:[#allocation4 + $0xf0] sm:$0xff] %v278
    %352 = vst [vmem:[#allocation4 + $0xf8] sm:$0xff] %v319
    %v353 = vld [vmem:[#allocation11] sm:$0xff]
    %v354 = vld [vmem:[#allocation11 + $0x8] sm:$0xff]
    %v355 = vld [vmem:[#allocation11 + $0x10] sm:$0xff]
    %v356 = vld [vmem:[#allocation11 + $0x18] sm:$0xff]
    %v357 = vld [vmem:[#allocation11 + $0x20] sm:$0xff]
    %v358 = vld [vmem:[#allocation11 + $0x28] sm:$0xff]
    %v359 = vld [vmem:[#allocation11 + $0x30] sm:$0xff]
    %v360 = vld [vmem:[#allocation11 + $0x38] sm:$0xff]
    %v361 = vld [vmem:[#allocation11 + $0x40] sm:$0xff]
    %v362 = vld [vmem:[#allocation11 + $0x48] sm:$0xff]
    %v363 = vld [vmem:[#allocation11 + $0x50] sm:$0xff]
    %v364 = vld [vmem:[#allocation11 + $0x58] sm:$0xff]
    %v365 = vld [vmem:[#allocation11 + $0x60] sm:$0xff]
    %v366 = vld [vmem:[#allocation11 + $0x68] sm:$0xff]
    %v367 = vld [vmem:[#allocation11 + $0x70] sm:$0xff]
    %v368 = vld [vmem:[#allocation11 + $0x78] sm:$0xff]
    %v369 = vld [vmem:[#allocation11 + $0x80] sm:$0xff]
    %v370 = vld [vmem:[#allocation11 + $0x88] sm:$0xff]
    %v371 = vld [vmem:[#allocation11 + $0x90] sm:$0xff]
    %v372 = vld [vmem:[#allocation11 + $0x98] sm:$0xff]
    %v373 = vld [vmem:[#allocation11 + $0xa0] sm:$0xff]
    %v374 = vld [vmem:[#allocation11 + $0xa8] sm:$0xff]
    %v375 = vld [vmem:[#allocation11 + $0xb0] sm:$0xff]
    %v376 = vld [vmem:[#allocation11 + $0xb8] sm:$0xff]
    %v377 = vld [vmem:[#allocation11 + $0xc0] sm:$0xff]
    %v378 = vld [vmem:[#allocation11 + $0xc8] sm:$0xff]
    %v379 = vld [vmem:[#allocation11 + $0xd0] sm:$0xff]
    %v380 = vld [vmem:[#allocation11 + $0xd8] sm:$0xff]
    %v381 = vld [vmem:[#allocation11 + $0xe0] sm:$0xff]
    %v382 = vld [vmem:[#allocation11 + $0xe8] sm:$0xff]
    %v383 = vld [vmem:[#allocation11 + $0xf0] sm:$0xff]
    %v384 = vld [vmem:[#allocation11 + $0xf8] sm:$0xff]
    %v385 = vld [vmem:[#allocation11 + $0x100] sm:$0xff]
    %v386 = vld [vmem:[#allocation11 + $0x108] sm:$0xff]
    %v387 = vld [vmem:[#allocation11 + $0x110] sm:$0xff]
    %v388 = vld [vmem:[#allocation11 + $0x118] sm:$0xff]
    %v389 = vld [vmem:[#allocation11 + $0x120] sm:$0xff]
    %v390 = vld [vmem:[#allocation11 + $0x128] sm:$0xff]
    %v391 = vld [vmem:[#allocation11 + $0x130] sm:$0xff]
    %v392 = vld [vmem:[#allocation11 + $0x138] sm:$0xff]
    %v393 = vld [vmem:[#allocation11 + $0x140] sm:$0xff]
    %v394 = vld [vmem:[#allocation11 + $0x148] sm:$0xff]
    %v395 = vld [vmem:[#allocation11 + $0x150] sm:$0xff]
    %v396 = vld [vmem:[#allocation11 + $0x158] sm:$0xff]
    %v397 = vld [vmem:[#allocation11 + $0x160] sm:$0xff]
    %v398 = vld [vmem:[#allocation11 + $0x168] sm:$0xff]
    %v399 = vld [vmem:[#allocation11 + $0x170] sm:$0xff]
    %v400 = vld [vmem:[#allocation11 + $0x178] sm:$0xff]
    %v401 = vld [vmem:[#allocation11 + $0x180] sm:$0xff]
    %v402 = vld [vmem:[#allocation11 + $0x188] sm:$0xff]
    %v403 = vld [vmem:[#allocation11 + $0x190] sm:$0xff]
    %v404 = vld [vmem:[#allocation11 + $0x198] sm:$0xff]
    %v405 = vld [vmem:[#allocation11 + $0x1a0] sm:$0xff]
    %v406 = vld [vmem:[#allocation11 + $0x1a8] sm:$0xff]
    %v407 = vld [vmem:[#allocation11 + $0x1b0] sm:$0xff]
    %v408 = vld [vmem:[#allocation11 + $0x1b8] sm:$0xff]
    %v409 = vld [vmem:[#allocation11 + $0x1c0] sm:$0xff]
    %v410 = vld [vmem:[#allocation11 + $0x1c8] sm:$0xff]
    %v411 = vld [vmem:[#allocation11 + $0x1d0] sm:$0xff]
    %v412 = vld [vmem:[#allocation11 + $0x1d8] sm:$0xff]
    %v413 = vld [vmem:[#allocation11 + $0x1e0] sm:$0xff]
    %v414 = vld [vmem:[#allocation11 + $0x1e8] sm:$0xff]
    %v415 = vld [vmem:[#allocation11 + $0x1f0] sm:$0xff]
    %v416 = vld [vmem:[#allocation11 + $0x1f8] sm:$0xff]
    %v417 = vld [vmem:[#allocation2] sm:$0xff]
    %v418 = vld [vmem:[#allocation3] sm:$0xff]
    %v419 = vld [vmem:[#allocation4] sm:$0xff]
    %v420 = vld [vmem:[#allocation4 + $0x8] sm:$0xff]
    %v421 = vld [vmem:[#allocation4 + $0x10] sm:$0xff]
    %v422 = vld [vmem:[#allocation4 + $0x18] sm:$0xff]
    %423 = vmatpush.msra.mxu0 %v413
    %424 = vmatpush.msra.mxu0 %v409
    %425 = vmatpush.msra.mxu0 %v405
    %426 = vmatpush.msra.mxu0 %v401
    %427 = vmatpush.msra.mxu0 %v397
    %428 = vmatpush.msra.mxu0 %v393
    %429 = vmatpush.msra.mxu0 %v389
    %430 = vmatpush.msra.mxu0 %v385
    %431 = vmatpush.msra.mxu0 %v381
    %432 = vmatpush.msra.mxu0 %v377
    %433 = vmatpush.msra.mxu0 %v373
    %434 = vmatpush.msra.mxu0 %v369
    %435 = vmatpush.msra.mxu0 %v365
    %436 = vmatpush.msra.mxu0 %v361
    %437 = vmatpush.msra.mxu0 %v357
    %438 = vmatpush.msra.mxu0 %v353
    %439 = vmatmul.f32.gmra.mxu0 %v417
    %v440 = vpop.f32.mrf.mxu0
    %v441 = vadd.f32 0.0, %v440
    %442 = vdwg.mxu0
    %443 = vmatpush.msra.mxu0 %v414
    %444 = vmatpush.msra.mxu0 %v410
    %445 = vmatpush.msra.mxu0 %v406
    %446 = vmatpush.msra.mxu0 %v402
    %447 = vmatpush.msra.mxu0 %v398
    %448 = vmatpush.msra.mxu0 %v394
    %449 = vmatpush.msra.mxu0 %v390
    %450 = vmatpush.msra.mxu0 %v386
    %451 = vmatpush.msra.mxu0 %v382
    %452 = vmatpush.msra.mxu0 %v378
    %453 = vmatpush.msra.mxu0 %v374
    %454 = vmatpush.msra.mxu0 %v370
    %455 = vmatpush.msra.mxu0 %v366
    %456 = vmatpush.msra.mxu0 %v362
    %457 = vmatpush.msra.mxu0 %v358
    %458 = vmatpush.msra.mxu0 %v354
    %459 = vmatmul.f32.gmra.mxu0 %v417
    %v460 = vpop.f32.mrf.mxu0
    %v461 = vadd.f32 0.0, %v460
    %462 = vdwg.mxu0
    %463 = vmatpush.msra.mxu0 %v415
    %464 = vmatpush.msra.mxu0 %v411
    %465 = vmatpush.msra.mxu0 %v407
    %466 = vmatpush.msra.mxu0 %v403
    %467 = vmatpush.msra.mxu0 %v399
    %468 = vmatpush.msra.mxu0 %v395
    %469 = vmatpush.msra.mxu0 %v391
    %470 = vmatpush.msra.mxu0 %v387
    %471 = vmatpush.msra.mxu0 %v383
    %472 = vmatpush.msra.mxu0 %v379
    %473 = vmatpush.msra.mxu0 %v375
    %474 = vmatpush.msra.mxu0 %v371
    %475 = vmatpush.msra.mxu0 %v367
    %476 = vmatpush.msra.mxu0 %v363
    %477 = vmatpush.msra.mxu0 %v359
    %478 = vmatpush.msra.mxu0 %v355
    %479 = vmatmul.f32.gmra.mxu0 %v417
    %v480 = vpop.f32.mrf.mxu0
    %v481 = vadd.f32 0.0, %v480
    %482 = vdwg.mxu0
    %483 = vmatpush.msra.mxu0 %v416
    %484 = vmatpush.msra.mxu0 %v412
    %485 = vmatpush.msra.mxu0 %v408
    %486 = vmatpush.msra.mxu0 %v404
    %487 = vmatpush.msra.mxu0 %v400
    %488 = vmatpush.msra.mxu0 %v396
    %489 = vmatpush.msra.mxu0 %v392
    %490 = vmatpush.msra.mxu0 %v388
    %491 = vmatpush.msra.mxu0 %v384
    %492 = vmatpush.msra.mxu0 %v380
    %493 = vmatpush.msra.mxu0 %v376
    %494 = vmatpush.msra.mxu0 %v372
    %495 = vmatpush.msra.mxu0 %v368
    %496 = vmatpush.msra.mxu0 %v364
    %497 = vmatpush.msra.mxu0 %v360
    %498 = vmatpush.msra.mxu0 %v356
    %499 = vmatmul.f32.gmra.mxu0 %v417
    %v500 = vpop.f32.mrf.mxu0
    %v501 = vadd.f32 0.0, %v500
    %502 = vdwg.mxu0
    %v503 = vadd.f32 %v419, %v441
    %v504 = vadd.f32 %v420, %v461
    %v505 = vadd.f32 %v421, %v481
    %v506 = vadd.f32 %v422, %v501
    %v507 = vmul.f32 %v503, 0.5
    %v508 = vtanh.pop %v507
    %v509 = vmul.f32 %v508, 0.5
    %v510 = vadd.f32 %v509, 0.5
    %v511 = vmul.f32 %v504, 0.5
    %v512 = vtanh.pop %v511
    %v513 = vmul.f32 %v512, 0.5
    %v514 = vadd.f32 %v513, 0.5
    %v515 = vtanh.pop %v505
    %v516 = vmul.f32 %v506, 0.5
    %v517 = vtanh.pop %v516
    %v518 = vmul.f32 %v517, 0.5
    %v519 = vadd.f32 %v518, 0.5
    %v520 = vmul.f32 %v514, %v418
    %v521 = vmul.f32 %v510, %v515
    %v522 = vadd.f32 %v520, %v521
    %v523 = vtanh.pop %v522
    %v524 = vmul.f32 %v519, %v523
    %s525 = scalar_lea.vmem [#allocation4], 32
    %v526 = vld [vmem:[%s525] sm:$0xff]
    %v527 = vld [vmem:[%s525 + $0x8] sm:$0xff]
    %v528 = vld [vmem:[%s525 + $0x10] sm:$0xff]
    %v529 = vld [vmem:[%s525 + $0x18] sm:$0xff]
    %530 = vmatpush.msra.mxu0 %v413
    %531 = vmatpush.msra.mxu0 %v409
    %532 = vmatpush.msra.mxu0 %v405
    %533 = vmatpush.msra.mxu0 %v401
    %534 = vmatpush.msra.mxu0 %v397
    %535 = vmatpush.msra.mxu0 %v393
    %536 = vmatpush.msra.mxu0 %v389
    %537 = vmatpush.msra.mxu0 %v385
    %538 = vmatpush.msra.mxu0 %v381
    %539 = vmatpush.msra.mxu0 %v377
    %540 = vmatpush.msra.mxu0 %v373
    %541 = vmatpush.msra.mxu0 %v369
    %542 = vmatpush.msra.mxu0 %v365
    %543 = vmatpush.msra.mxu0 %v361
    %544 = vmatpush.msra.mxu0 %v357
    %545 = vmatpush.msra.mxu0 %v353
    %546 = vmatmul.f32.gmra.mxu0 %v524
    %v547 = vpop.f32.mrf.mxu0
    %v548 = vadd.f32 0.0, %v547
    %549 = vdwg.mxu0
    %550 = vmatpush.msra.mxu0 %v414
    %551 = vmatpush.msra.mxu0 %v410
    %552 = vmatpush.msra.mxu0 %v406
    %553 = vmatpush.msra.mxu0 %v402
    %554 = vmatpush.msra.mxu0 %v398
    %555 = vmatpush.msra.mxu0 %v394
    %556 = vmatpush.msra.mxu0 %v390
    %557 = vmatpush.msra.mxu0 %v386
    %558 = vmatpush.msra.mxu0 %v382
    %559 = vmatpush.msra.mxu0 %v378
    %560 = vmatpush.msra.mxu0 %v374
    %561 = vmatpush.msra.mxu0 %v370
    %562 = vmatpush.msra.mxu0 %v366
    %563 = vmatpush.msra.mxu0 %v362
    %564 = vmatpush.msra.mxu0 %v358
    %565 = vmatpush.msra.mxu0 %v354
    %566 = vmatmul.f32.gmra.mxu0 %v524
    %v567 = vpop.f32.mrf.mxu0
    %v568 = vadd.f32 0.0, %v567
    %569 = vdwg.mxu0
    %570 = vmatpush.msra.mxu0 %v415
    %571 = vmatpush.msra.mxu0 %v411
    %572 = vmatpush.msra.mxu0 %v407
    %573 = vmatpush.msra.mxu0 %v403
    %574 = vmatpush.msra.mxu0 %v399
    %575 = vmatpush.msra.mxu0 %v395
    %576 = vmatpush.msra.mxu0 %v391
    %577 = vmatpush.msra.mxu0 %v387
    %578 = vmatpush.msra.mxu0 %v383
    %579 = vmatpush.msra.mxu0 %v379
    %580 = vmatpush.msra.mxu0 %v375
    %581 = vmatpush.msra.mxu0 %v371
    %582 = vmatpush.msra.mxu0 %v367
    %583 = vmatpush.msra.mxu0 %v363
    %584 = vmatpush.msra.mxu0 %v359
    %585 = vmatpush.msra.mxu0 %v355
    %586 = vmatmul.f32.gmra.mxu0 %v524
    %v587 = vpop.f32.mrf.mxu0
    %v588 = vadd.f32 0.0, %v587
    %589 = vdwg.mxu0
    %590 = vmatpush.msra.mxu0 %v416
    %591 = vmatpush.msra.mxu0 %v412
    %592 = vmatpush.msra.mxu0 %v408
    %593 = vmatpush.msra.mxu0 %v404
    %594 = vmatpush.msra.mxu0 %v400
    %595 = vmatpush.msra.mxu0 %v396
    %596 = vmatpush.msra.mxu0 %v392
    %597 = vmatpush.msra.mxu0 %v388
    %598 = vmatpush.msra.mxu0 %v384
    %599 = vmatpush.msra.mxu0 %v380
    %600 = vmatpush.msra.mxu0 %v376
    %601 = vmatpush.msra.mxu0 %v372
    %602 = vmatpush.msra.mxu0 %v368
    %603 = vmatpush.msra.mxu0 %v364
    %604 = vmatpush.msra.mxu0 %v360
    %605 = vmatpush.msra.mxu0 %v356
    %606 = vmatmul.f32.gmra.mxu0 %v524
    %v607 = vpop.f32.mrf.mxu0
    %v608 = vadd.f32 0.0, %v607
    %609 = vdwg.mxu0
    %v610 = vadd.f32 %v526, %v548
    %v611 = vadd.f32 %v527, %v568
    %v612 = vadd.f32 %v528, %v588
    %v613 = vadd.f32 %v529, %v608
    %v614 = vmul.f32 %v610, 0.5
    %v615 = vtanh.pop %v614
    %v616 = vmul.f32 %v615, 0.5
    %v617 = vadd.f32 %v616, 0.5
    %v618 = vmul.f32 %v611, 0.5
    %v619 = vtanh.pop %v618
    %v620 = vmul.f32 %v619, 0.5
    %v621 = vadd.f32 %v620, 0.5
    %v622 = vtanh.pop %v612
    %v623 = vmul.f32 %v613, 0.5
    %v624 = vtanh.pop %v623
    %v625 = vmul.f32 %v624, 0.5
    %v626 = vadd.f32 %v625, 0.5
    %v627 = vmul.f32 %v621, %v522
    %v628 = vmul.f32 %v617, %v622
    %v629 = vadd.f32 %v627, %v628
    %v630 = vtanh.pop %v629
    %v631 = vmul.f32 %v626, %v630
    %s632 = scalar_lea.vmem [#allocation4], 64
    %v633 = vld [vmem:[%s632] sm:$0xff]
    %v634 = vld [vmem:[%s632 + $0x8] sm:$0xff]
    %v635 = vld [vmem:[%s632 + $0x10] sm:$0xff]
    %v636 = vld [vmem:[%s632 + $0x18] sm:$0xff]
    %637 = vmatpush.msra.mxu0 %v413
    %638 = vmatpush.msra.mxu0 %v409
    %639 = vmatpush.msra.mxu0 %v405
    %640 = vmatpush.msra.mxu0 %v401
    %641 = vmatpush.msra.mxu0 %v397
    %642 = vmatpush.msra.mxu0 %v393
    %643 = vmatpush.msra.mxu0 %v389
    %644 = vmatpush.msra.mxu0 %v385
    %645 = vmatpush.msra.mxu0 %v381
    %646 = vmatpush.msra.mxu0 %v377
    %647 = vmatpush.msra.mxu0 %v373
    %648 = vmatpush.msra.mxu0 %v369
    %649 = vmatpush.msra.mxu0 %v365
    %650 = vmatpush.msra.mxu0 %v361
    %651 = vmatpush.msra.mxu0 %v357
    %652 = vmatpush.msra.mxu0 %v353
    %653 = vmatmul.f32.gmra.mxu0 %v631
    %v654 = vpop.f32.mrf.mxu0
    %v655 = vadd.f32 0.0, %v654
    %656 = vdwg.mxu0
    %657 = vmatpush.msra.mxu0 %v414
    %658 = vmatpush.msra.mxu0 %v410
    %659 = vmatpush.msra.mxu0 %v406
    %660 = vmatpush.msra.mxu0 %v402
    %661 = vmatpush.msra.mxu0 %v398
    %662 = vmatpush.msra.mxu0 %v394
    %663 = vmatpush.msra.mxu0 %v390
    %664 = vmatpush.msra.mxu0 %v386
    %665 = vmatpush.msra.mxu0 %v382
    %666 = vmatpush.msra.mxu0 %v378
    %667 = vmatpush.msra.mxu0 %v374
    %668 = vmatpush.msra.mxu0 %v370
    %669 = vmatpush.msra.mxu0 %v366
    %670 = vmatpush.msra.mxu0 %v362
    %671 = vmatpush.msra.mxu0 %v358
    %672 = vmatpush.msra.mxu0 %v354
    %673 = vmatmul.f32.gmra.mxu0 %v631
    %v674 = vpop.f32.mrf.mxu0
    %v675 = vadd.f32 0.0, %v674
    %676 = vdwg.mxu0
    %677 = vmatpush.msra.mxu0 %v415
    %678 = vmatpush.msra.mxu0 %v411
    %679 = vmatpush.msra.mxu0 %v407
    %680 = vmatpush.msra.mxu0 %v403
    %681 = vmatpush.msra.mxu0 %v399
    %682 = vmatpush.msra.mxu0 %v395
    %683 = vmatpush.msra.mxu0 %v391
    %684 = vmatpush.msra.mxu0 %v387
    %685 = vmatpush.msra.mxu0 %v383
    %686 = vmatpush.msra.mxu0 %v379
    %687 = vmatpush.msra.mxu0 %v375
    %688 = vmatpush.msra.mxu0 %v371
    %689 = vmatpush.msra.mxu0 %v367
    %690 = vmatpush.msra.mxu0 %v363
    %691 = vmatpush.msra.mxu0 %v359
    %692 = vmatpush.msra.mxu0 %v355
    %693 = vmatmul.f32.gmra.mxu0 %v631
    %v694 = vpop.f32.mrf.mxu0
    %v695 = vadd.f32 0.0, %v694
    %696 = vdwg.mxu0
    %697 = vmatpush.msra.mxu0 %v416
    %698 = vmatpush.msra.mxu0 %v412
    %699 = vmatpush.msra.mxu0 %v408
    %700 = vmatpush.msra.mxu0 %v404
    %701 = vmatpush.msra.mxu0 %v400
    %702 = vmatpush.msra.mxu0 %v396
    %703 = vmatpush.msra.mxu0 %v392
    %704 = vmatpush.msra.mxu0 %v388
    %705 = vmatpush.msra.mxu0 %v384
    %706 = vmatpush.msra.mxu0 %v380
    %707 = vmatpush.msra.mxu0 %v376
    %708 = vmatpush.msra.mxu0 %v372
    %709 = vmatpush.msra.mxu0 %v368
    %710 = vmatpush.msra.mxu0 %v364
    %711 = vmatpush.msra.mxu0 %v360
    %712 = vmatpush.msra.mxu0 %v356
    %713 = vmatmul.f32.gmra.mxu0 %v631
    %v714 = vpop.f32.mrf.mxu0
    %v715 = vadd.f32 0.0, %v714
    %716 = vdwg.mxu0
    %v717 = vadd.f32 %v633, %v655
    %v718 = vadd.f32 %v634, %v675
    %v719 = vadd.f32 %v635, %v695
    %v720 = vadd.f32 %v636, %v715
    %v721 = vmul.f32 %v717, 0.5
    %v722 = vtanh.pop %v721
    %v723 = vmul.f32 %v722, 0.5
    %v724 = vadd.f32 %v723, 0.5
    %v725 = vmul.f32 %v718, 0.5
    %v726 = vtanh.pop %v725
    %v727 = vmul.f32 %v726, 0.5
    %v728 = vadd.f32 %v727, 0.5
    %v729 = vtanh.pop %v719
    %v730 = vmul.f32 %v720, 0.5
    %v731 = vtanh.pop %v730
    %v732 = vmul.f32 %v731, 0.5
    %v733 = vadd.f32 %v732, 0.5
    %v734 = vmul.f32 %v728, %v629
    %v735 = vmul.f32 %v724, %v729
    %v736 = vadd.f32 %v734, %v735
    %v737 = vtanh.pop %v736
    %v738 = vmul.f32 %v733, %v737
    %s739 = scalar_lea.vmem [#allocation4], 96
    %v740 = vld [vmem:[%s739] sm:$0xff]
    %v741 = vld [vmem:[%s739 + $0x8] sm:$0xff]
    %v742 = vld [vmem:[%s739 + $0x10] sm:$0xff]
    %v743 = vld [vmem:[%s739 + $0x18] sm:$0xff]
    %744 = vmatpush.msra.mxu0 %v413
    %745 = vmatpush.msra.mxu0 %v409
    %746 = vmatpush.msra.mxu0 %v405
    %747 = vmatpush.msra.mxu0 %v401
    %748 = vmatpush.msra.mxu0 %v397
    %749 = vmatpush.msra.mxu0 %v393
    %750 = vmatpush.msra.mxu0 %v389
    %751 = vmatpush.msra.mxu0 %v385
    %752 = vmatpush.msra.mxu0 %v381
    %753 = vmatpush.msra.mxu0 %v377
    %754 = vmatpush.msra.mxu0 %v373
    %755 = vmatpush.msra.mxu0 %v369
    %756 = vmatpush.msra.mxu0 %v365
    %757 = vmatpush.msra.mxu0 %v361
    %758 = vmatpush.msra.mxu0 %v357
    %759 = vmatpush.msra.mxu0 %v353
    %760 = vmatmul.f32.gmra.mxu0 %v738
    %v761 = vpop.f32.mrf.mxu0
    %v762 = vadd.f32 0.0, %v761
    %763 = vdwg.mxu0
    %764 = vmatpush.msra.mxu0 %v414
    %765 = vmatpush.msra.mxu0 %v410
    %766 = vmatpush.msra.mxu0 %v406
    %767 = vmatpush.msra.mxu0 %v402
    %768 = vmatpush.msra.mxu0 %v398
    %769 = vmatpush.msra.mxu0 %v394
    %770 = vmatpush.msra.mxu0 %v390
    %771 = vmatpush.msra.mxu0 %v386
    %772 = vmatpush.msra.mxu0 %v382
    %773 = vmatpush.msra.mxu0 %v378
    %774 = vmatpush.msra.mxu0 %v374
    %775 = vmatpush.msra.mxu0 %v370
    %776 = vmatpush.msra.mxu0 %v366
    %777 = vmatpush.msra.mxu0 %v362
    %778 = vmatpush.msra.mxu0 %v358
    %779 = vmatpush.msra.mxu0 %v354
    %780 = vmatmul.f32.gmra.mxu0 %v738
    %v781 = vpop.f32.mrf.mxu0
    %v782 = vadd.f32 0.0, %v781
    %783 = vdwg.mxu0
    %784 = vmatpush.msra.mxu0 %v415
    %785 = vmatpush.msra.mxu0 %v411
    %786 = vmatpush.msra.mxu0 %v407
    %787 = vmatpush.msra.mxu0 %v403
    %788 = vmatpush.msra.mxu0 %v399
    %789 = vmatpush.msra.mxu0 %v395
    %790 = vmatpush.msra.mxu0 %v391
    %791 = vmatpush.msra.mxu0 %v387
    %792 = vmatpush.msra.mxu0 %v383
    %793 = vmatpush.msra.mxu0 %v379
    %794 = vmatpush.msra.mxu0 %v375
    %795 = vmatpush.msra.mxu0 %v371
    %796 = vmatpush.msra.mxu0 %v367
    %797 = vmatpush.msra.mxu0 %v363
    %798 = vmatpush.msra.mxu0 %v359
    %799 = vmatpush.msra.mxu0 %v355
    %800 = vmatmul.f32.gmra.mxu0 %v738
    %v801 = vpop.f32.mrf.mxu0
    %v802 = vadd.f32 0.0, %v801
    %803 = vdwg.mxu0
    %804 = vmatpush.msra.mxu0 %v416
    %805 = vmatpush.msra.mxu0 %v412
    %806 = vmatpush.msra.mxu0 %v408
    %807 = vmatpush.msra.mxu0 %v404
    %808 = vmatpush.msra.mxu0 %v400
    %809 = vmatpush.msra.mxu0 %v396
    %810 = vmatpush.msra.mxu0 %v392
    %811 = vmatpush.msra.mxu0 %v388
    %812 = vmatpush.msra.mxu0 %v384
    %813 = vmatpush.msra.mxu0 %v380
    %814 = vmatpush.msra.mxu0 %v376
    %815 = vmatpush.msra.mxu0 %v372
    %816 = vmatpush.msra.mxu0 %v368
    %817 = vmatpush.msra.mxu0 %v364
    %818 = vmatpush.msra.mxu0 %v360
    %819 = vmatpush.msra.mxu0 %v356
    %820 = vmatmul.f32.gmra.mxu0 %v738
    %v821 = vpop.f32.mrf.mxu0
    %v822 = vadd.f32 0.0, %v821
    %823 = vdwg.mxu0
    %v824 = vadd.f32 %v740, %v762
    %v825 = vadd.f32 %v741, %v782
    %v826 = vadd.f32 %v742, %v802
    %v827 = vadd.f32 %v743, %v822
    %v828 = vmul.f32 %v824, 0.5
    %v829 = vtanh.pop %v828
    %v830 = vmul.f32 %v829, 0.5
    %v831 = vadd.f32 %v830, 0.5
    %v832 = vmul.f32 %v825, 0.5
    %v833 = vtanh.pop %v832
    %v834 = vmul.f32 %v833, 0.5
    %v835 = vadd.f32 %v834, 0.5
    %v836 = vtanh.pop %v826
    %v837 = vmul.f32 %v827, 0.5
    %v838 = vtanh.pop %v837
    %v839 = vmul.f32 %v838, 0.5
    %v840 = vadd.f32 %v839, 0.5
    %v841 = vmul.f32 %v835, %v736
    %v842 = vmul.f32 %v831, %v836
    %v843 = vadd.f32 %v841, %v842
    %v844 = vtanh.pop %v843
    %v845 = vmul.f32 %v840, %v844
    %s846 = scalar_lea.vmem [#allocation4], 128
    %v847 = vld [vmem:[%s846] sm:$0xff]
    %v848 = vld [vmem:[%s846 + $0x8] sm:$0xff]
    %v849 = vld [vmem:[%s846 + $0x10] sm:$0xff]
    %v850 = vld [vmem:[%s846 + $0x18] sm:$0xff]
    %851 = vmatpush.msra.mxu0 %v413
    %852 = vmatpush.msra.mxu0 %v409
    %853 = vmatpush.msra.mxu0 %v405
    %854 = vmatpush.msra.mxu0 %v401
    %855 = vmatpush.msra.mxu0 %v397
    %856 = vmatpush.msra.mxu0 %v393
    %857 = vmatpush.msra.mxu0 %v389
    %858 = vmatpush.msra.mxu0 %v385
    %859 = vmatpush.msra.mxu0 %v381
    %860 = vmatpush.msra.mxu0 %v377
    %861 = vmatpush.msra.mxu0 %v373
    %862 = vmatpush.msra.mxu0 %v369
    %863 = vmatpush.msra.mxu0 %v365
    %864 = vmatpush.msra.mxu0 %v361
    %865 = vmatpush.msra.mxu0 %v357
    %866 = vmatpush.msra.mxu0 %v353
    %867 = vmatmul.f32.gmra.mxu0 %v845
    %v868 = vpop.f32.mrf.mxu0
    %v869 = vadd.f32 0.0, %v868
    %870 = vdwg.mxu0
    %871 = vmatpush.msra.mxu0 %v414
    %872 = vmatpush.msra.mxu0 %v410
    %873 = vmatpush.msra.mxu0 %v406
    %874 = vmatpush.msra.mxu0 %v402
    %875 = vmatpush.msra.mxu0 %v398
    %876 = vmatpush.msra.mxu0 %v394
    %877 = vmatpush.msra.mxu0 %v390
    %878 = vmatpush.msra.mxu0 %v386
    %879 = vmatpush.msra.mxu0 %v382
    %880 = vmatpush.msra.mxu0 %v378
    %881 = vmatpush.msra.mxu0 %v374
    %882 = vmatpush.msra.mxu0 %v370
    %883 = vmatpush.msra.mxu0 %v366
    %884 = vmatpush.msra.mxu0 %v362
    %885 = vmatpush.msra.mxu0 %v358
    %886 = vmatpush.msra.mxu0 %v354
    %887 = vmatmul.f32.gmra.mxu0 %v845
    %v888 = vpop.f32.mrf.mxu0
    %v889 = vadd.f32 0.0, %v888
    %890 = vdwg.mxu0
    %891 = vmatpush.msra.mxu0 %v415
    %892 = vmatpush.msra.mxu0 %v411
    %893 = vmatpush.msra.mxu0 %v407
    %894 = vmatpush.msra.mxu0 %v403
    %895 = vmatpush.msra.mxu0 %v399
    %896 = vmatpush.msra.mxu0 %v395
    %897 = vmatpush.msra.mxu0 %v391
    %898 = vmatpush.msra.mxu0 %v387
    %899 = vmatpush.msra.mxu0 %v383
    %900 = vmatpush.msra.mxu0 %v379
    %901 = vmatpush.msra.mxu0 %v375
    %902 = vmatpush.msra.mxu0 %v371
    %903 = vmatpush.msra.mxu0 %v367
    %904 = vmatpush.msra.mxu0 %v363
    %905 = vmatpush.msra.mxu0 %v359
    %906 = vmatpush.msra.mxu0 %v355
    %907 = vmatmul.f32.gmra.mxu0 %v845
    %v908 = vpop.f32.mrf.mxu0
    %v909 = vadd.f32 0.0, %v908
    %910 = vdwg.mxu0
    %911 = vmatpush.msra.mxu0 %v416
    %912 = vmatpush.msra.mxu0 %v412
    %913 = vmatpush.msra.mxu0 %v408
    %914 = vmatpush.msra.mxu0 %v404
    %915 = vmatpush.msra.mxu0 %v400
    %916 = vmatpush.msra.mxu0 %v396
    %917 = vmatpush.msra.mxu0 %v392
    %918 = vmatpush.msra.mxu0 %v388
    %919 = vmatpush.msra.mxu0 %v384
    %920 = vmatpush.msra.mxu0 %v380
    %921 = vmatpush.msra.mxu0 %v376
    %922 = vmatpush.msra.mxu0 %v372
    %923 = vmatpush.msra.mxu0 %v368
    %924 = vmatpush.msra.mxu0 %v364
    %925 = vmatpush.msra.mxu0 %v360
    %926 = vmatpush.msra.mxu0 %v356
    %927 = vmatmul.f32.gmra.mxu0 %v845
    %v928 = vpop.f32.mrf.mxu0
    %v929 = vadd.f32 0.0, %v928
    %930 = vdwg.mxu0
    %v931 = vadd.f32 %v847, %v869
    %v932 = vadd.f32 %v848, %v889
    %v933 = vadd.f32 %v849, %v909
    %v934 = vadd.f32 %v850, %v929
    %v935 = vmul.f32 %v931, 0.5
    %v936 = vtanh.pop %v935
    %v937 = vmul.f32 %v936, 0.5
    %v938 = vadd.f32 %v937, 0.5
    %v939 = vmul.f32 %v932, 0.5
    %v940 = vtanh.pop %v939
    %v941 = vmul.f32 %v940, 0.5
    %v942 = vadd.f32 %v941, 0.5
    %v943 = vtanh.pop %v933
    %v944 = vmul.f32 %v934, 0.5
    %v945 = vtanh.pop %v944
    %v946 = vmul.f32 %v945, 0.5
    %v947 = vadd.f32 %v946, 0.5
    %v948 = vmul.f32 %v942, %v843
    %v949 = vmul.f32 %v938, %v943
    %v950 = vadd.f32 %v948, %v949
    %v951 = vtanh.pop %v950
    %v952 = vmul.f32 %v947, %v951
    %s953 = scalar_lea.vmem [#allocation4], 160
    %v954 = vld [vmem:[%s953] sm:$0xff]
    %v955 = vld [vmem:[%s953 + $0x8] sm:$0xff]
    %v956 = vld [vmem:[%s953 + $0x10] sm:$0xff]
    %v957 = vld [vmem:[%s953 + $0x18] sm:$0xff]
    %958 = vmatpush.msra.mxu0 %v413
    %959 = vmatpush.msra.mxu0 %v409
    %960 = vmatpush.msra.mxu0 %v405
    %961 = vmatpush.msra.mxu0 %v401
    %962 = vmatpush.msra.mxu0 %v397
    %963 = vmatpush.msra.mxu0 %v393
    %964 = vmatpush.msra.mxu0 %v389
    %965 = vmatpush.msra.mxu0 %v385
    %966 = vmatpush.msra.mxu0 %v381
    %967 = vmatpush.msra.mxu0 %v377
    %968 = vmatpush.msra.mxu0 %v373
    %969 = vmatpush.msra.mxu0 %v369
    %970 = vmatpush.msra.mxu0 %v365
    %971 = vmatpush.msra.mxu0 %v361
    %972 = vmatpush.msra.mxu0 %v357
    %973 = vmatpush.msra.mxu0 %v353
    %974 = vmatmul.f32.gmra.mxu0 %v952
    %v975 = vpop.f32.mrf.mxu0
    %v976 = vadd.f32 0.0, %v975
    %977 = vdwg.mxu0
    %978 = vmatpush.msra.mxu0 %v414
    %979 = vmatpush.msra.mxu0 %v410
    %980 = vmatpush.msra.mxu0 %v406
    %981 = vmatpush.msra.mxu0 %v402
    %982 = vmatpush.msra.mxu0 %v398
    %983 = vmatpush.msra.mxu0 %v394
    %984 = vmatpush.msra.mxu0 %v390
    %985 = vmatpush.msra.mxu0 %v386
    %986 = vmatpush.msra.mxu0 %v382
    %987 = vmatpush.msra.mxu0 %v378
    %988 = vmatpush.msra.mxu0 %v374
    %989 = vmatpush.msra.mxu0 %v370
    %990 = vmatpush.msra.mxu0 %v366
    %991 = vmatpush.msra.mxu0 %v362
    %992 = vmatpush.msra.mxu0 %v358
    %993 = vmatpush.msra.mxu0 %v354
    %994 = vmatmul.f32.gmra.mxu0 %v952
    %v995 = vpop.f32.mrf.mxu0
    %v996 = vadd.f32 0.0, %v995
    %997 = vdwg.mxu0
    %998 = vmatpush.msra.mxu0 %v415
    %999 = vmatpush.msra.mxu0 %v411
    %1000 = vmatpush.msra.mxu0 %v407
    %1001 = vmatpush.msra.mxu0 %v403
    %1002 = vmatpush.msra.mxu0 %v399
    %1003 = vmatpush.msra.mxu0 %v395
    %1004 = vmatpush.msra.mxu0 %v391
    %1005 = vmatpush.msra.mxu0 %v387
    %1006 = vmatpush.msra.mxu0 %v383
    %1007 = vmatpush.msra.mxu0 %v379
    %1008 = vmatpush.msra.mxu0 %v375
    %1009 = vmatpush.msra.mxu0 %v371
    %1010 = vmatpush.msra.mxu0 %v367
    %1011 = vmatpush.msra.mxu0 %v363
    %1012 = vmatpush.msra.mxu0 %v359
    %1013 = vmatpush.msra.mxu0 %v355
    %1014 = vmatmul.f32.gmra.mxu0 %v952
    %v1015 = vpop.f32.mrf.mxu0
    %v1016 = vadd.f32 0.0, %v1015
    %1017 = vdwg.mxu0
    %1018 = vmatpush.msra.mxu0 %v416
    %1019 = vmatpush.msra.mxu0 %v412
    %1020 = vmatpush.msra.mxu0 %v408
    %1021 = vmatpush.msra.mxu0 %v404
    %1022 = vmatpush.msra.mxu0 %v400
    %1023 = vmatpush.msra.mxu0 %v396
    %1024 = vmatpush.msra.mxu0 %v392
    %1025 = vmatpush.msra.mxu0 %v388
    %1026 = vmatpush.msra.mxu0 %v384
    %1027 = vmatpush.msra.mxu0 %v380
    %1028 = vmatpush.msra.mxu0 %v376
    %1029 = vmatpush.msra.mxu0 %v372
    %1030 = vmatpush.msra.mxu0 %v368
    %1031 = vmatpush.msra.mxu0 %v364
    %1032 = vmatpush.msra.mxu0 %v360
    %1033 = vmatpush.msra.mxu0 %v356
    %1034 = vmatmul.f32.gmra.mxu0 %v952
    %v1035 = vpop.f32.mrf.mxu0
    %v1036 = vadd.f32 0.0, %v1035
    %1037 = vdwg.mxu0
    %v1038 = vadd.f32 %v954, %v976
    %v1039 = vadd.f32 %v955, %v996
    %v1040 = vadd.f32 %v956, %v1016
    %v1041 = vadd.f32 %v957, %v1036
    %v1042 = vmul.f32 %v1038, 0.5
    %v1043 = vtanh.pop %v1042
    %v1044 = vmul.f32 %v1043, 0.5
    %v1045 = vadd.f32 %v1044, 0.5
    %v1046 = vmul.f32 %v1039, 0.5
    %v1047 = vtanh.pop %v1046
    %v1048 = vmul.f32 %v1047, 0.5
    %v1049 = vadd.f32 %v1048, 0.5
    %v1050 = vtanh.pop %v1040
    %v1051 = vmul.f32 %v1041, 0.5
    %v1052 = vtanh.pop %v1051
    %v1053 = vmul.f32 %v1052, 0.5
    %v1054 = vadd.f32 %v1053, 0.5
    %v1055 = vmul.f32 %v1049, %v950
    %v1056 = vmul.f32 %v1045, %v1050
    %v1057 = vadd.f32 %v1055, %v1056
    %v1058 = vtanh.pop %v1057
    %v1059 = vmul.f32 %v1054, %v1058
    %s1060 = scalar_lea.vmem [#allocation4], 192
    %v1061 = vld [vmem:[%s1060] sm:$0xff]
    %v1062 = vld [vmem:[%s1060 + $0x8] sm:$0xff]
    %v1063 = vld [vmem:[%s1060 + $0x10] sm:$0xff]
    %v1064 = vld [vmem:[%s1060 + $0x18] sm:$0xff]
    %1065 = vmatpush.msra.mxu0 %v413
    %1066 = vmatpush.msra.mxu0 %v409
    %1067 = vmatpush.msra.mxu0 %v405
    %1068 = vmatpush.msra.mxu0 %v401
    %1069 = vmatpush.msra.mxu0 %v397
    %1070 = vmatpush.msra.mxu0 %v393
    %1071 = vmatpush.msra.mxu0 %v389
    %1072 = vmatpush.msra.mxu0 %v385
    %1073 = vmatpush.msra.mxu0 %v381
    %1074 = vmatpush.msra.mxu0 %v377
    %1075 = vmatpush.msra.mxu0 %v373
    %1076 = vmatpush.msra.mxu0 %v369
    %1077 = vmatpush.msra.mxu0 %v365
    %1078 = vmatpush.msra.mxu0 %v361
    %1079 = vmatpush.msra.mxu0 %v357
    %1080 = vmatpush.msra.mxu0 %v353
    %1081 = vmatmul.f32.gmra.mxu0 %v1059
    %v1082 = vpop.f32.mrf.mxu0
    %v1083 = vadd.f32 0.0, %v1082
    %1084 = vdwg.mxu0
    %1085 = vmatpush.msra.mxu0 %v414
    %1086 = vmatpush.msra.mxu0 %v410
    %1087 = vmatpush.msra.mxu0 %v406
    %1088 = vmatpush.msra.mxu0 %v402
    %1089 = vmatpush.msra.mxu0 %v398
    %1090 = vmatpush.msra.mxu0 %v394
    %1091 = vmatpush.msra.mxu0 %v390
    %1092 = vmatpush.msra.mxu0 %v386
    %1093 = vmatpush.msra.mxu0 %v382
    %1094 = vmatpush.msra.mxu0 %v378
    %1095 = vmatpush.msra.mxu0 %v374
    %1096 = vmatpush.msra.mxu0 %v370
    %1097 = vmatpush.msra.mxu0 %v366
    %1098 = vmatpush.msra.mxu0 %v362
    %1099 = vmatpush.msra.mxu0 %v358
    %1100 = vmatpush.msra.mxu0 %v354
    %1101 = vmatmul.f32.gmra.mxu0 %v1059
    %v1102 = vpop.f32.mrf.mxu0
    %v1103 = vadd.f32 0.0, %v1102
    %1104 = vdwg.mxu0
    %1105 = vmatpush.msra.mxu0 %v415
    %1106 = vmatpush.msra.mxu0 %v411
    %1107 = vmatpush.msra.mxu0 %v407
    %1108 = vmatpush.msra.mxu0 %v403
    %1109 = vmatpush.msra.mxu0 %v399
    %1110 = vmatpush.msra.mxu0 %v395
    %1111 = vmatpush.msra.mxu0 %v391
    %1112 = vmatpush.msra.mxu0 %v387
    %1113 = vmatpush.msra.mxu0 %v383
    %1114 = vmatpush.msra.mxu0 %v379
    %1115 = vmatpush.msra.mxu0 %v375
    %1116 = vmatpush.msra.mxu0 %v371
    %1117 = vmatpush.msra.mxu0 %v367
    %1118 = vmatpush.msra.mxu0 %v363
    %1119 = vmatpush.msra.mxu0 %v359
    %1120 = vmatpush.msra.mxu0 %v355
    %1121 = vmatmul.f32.gmra.mxu0 %v1059
    %v1122 = vpop.f32.mrf.mxu0
    %v1123 = vadd.f32 0.0, %v1122
    %1124 = vdwg.mxu0
    %1125 = vmatpush.msra.mxu0 %v416
    %1126 = vmatpush.msra.mxu0 %v412
    %1127 = vmatpush.msra.mxu0 %v408
    %1128 = vmatpush.msra.mxu0 %v404
    %1129 = vmatpush.msra.mxu0 %v400
    %1130 = vmatpush.msra.mxu0 %v396
    %1131 = vmatpush.msra.mxu0 %v392
    %1132 = vmatpush.msra.mxu0 %v388
    %1133 = vmatpush.msra.mxu0 %v384
    %1134 = vmatpush.msra.mxu0 %v380
    %1135 = vmatpush.msra.mxu0 %v376
    %1136 = vmatpush.msra.mxu0 %v372
    %1137 = vmatpush.msra.mxu0 %v368
    %1138 = vmatpush.msra.mxu0 %v364
    %1139 = vmatpush.msra.mxu0 %v360
    %1140 = vmatpush.msra.mxu0 %v356
    %1141 = vmatmul.f32.gmra.mxu0 %v1059
    %v1142 = vpop.f32.mrf.mxu0
    %v1143 = vadd.f32 0.0, %v1142
    %1144 = vdwg.mxu0
    %v1145 = vadd.f32 %v1061, %v1083
    %v1146 = vadd.f32 %v1062, %v1103
    %v1147 = vadd.f32 %v1063, %v1123
    %v1148 = vadd.f32 %v1064, %v1143
    %v1149 = vmul.f32 %v1145, 0.5
    %v1150 = vtanh.pop %v1149
    %v1151 = vmul.f32 %v1150, 0.5
    %v1152 = vadd.f32 %v1151, 0.5
    %v1153 = vmul.f32 %v1146, 0.5
    %v1154 = vtanh.pop %v1153
    %v1155 = vmul.f32 %v1154, 0.5
    %v1156 = vadd.f32 %v1155, 0.5
    %v1157 = vtanh.pop %v1147
    %v1158 = vmul.f32 %v1148, 0.5
    %v1159 = vtanh.pop %v1158
    %v1160 = vmul.f32 %v1159, 0.5
    %v1161 = vadd.f32 %v1160, 0.5
    %v1162 = vmul.f32 %v1156, %v1057
    %v1163 = vmul.f32 %v1152, %v1157
    %v1164 = vadd.f32 %v1162, %v1163
    %v1165 = vtanh.pop %v1164
    %v1166 = vmul.f32 %v1161, %v1165
    %s1167 = scalar_lea.vmem [#allocation4], 224
    %v1168 = vld [vmem:[%s1167] sm:$0xff]
    %v1169 = vld [vmem:[%s1167 + $0x8] sm:$0xff]
    %v1170 = vld [vmem:[%s1167 + $0x10] sm:$0xff]
    %v1171 = vld [vmem:[%s1167 + $0x18] sm:$0xff]
    %1172 = vmatpush.msra.mxu0 %v413
    %1173 = vmatpush.msra.mxu0 %v409
    %1174 = vmatpush.msra.mxu0 %v405
    %1175 = vmatpush.msra.mxu0 %v401
    %1176 = vmatpush.msra.mxu0 %v397
    %1177 = vmatpush.msra.mxu0 %v393
    %1178 = vmatpush.msra.mxu0 %v389
    %1179 = vmatpush.msra.mxu0 %v385
    %1180 = vmatpush.msra.mxu0 %v381
    %1181 = vmatpush.msra.mxu0 %v377
    %1182 = vmatpush.msra.mxu0 %v373
    %1183 = vmatpush.msra.mxu0 %v369
    %1184 = vmatpush.msra.mxu0 %v365
    %1185 = vmatpush.msra.mxu0 %v361
    %1186 = vmatpush.msra.mxu0 %v357
    %1187 = vmatpush.msra.mxu0 %v353
    %1188 = vmatmul.f32.gmra.mxu0 %v1166
    %v1189 = vpop.f32.mrf.mxu0
    %v1190 = vadd.f32 0.0, %v1189
    %1191 = vdwg.mxu0
    %1192 = vmatpush.msra.mxu0 %v414
    %1193 = vmatpush.msra.mxu0 %v410
    %1194 = vmatpush.msra.mxu0 %v406
    %1195 = vmatpush.msra.mxu0 %v402
    %1196 = vmatpush.msra.mxu0 %v398
    %1197 = vmatpush.msra.mxu0 %v394
    %1198 = vmatpush.msra.mxu0 %v390
    %1199 = vmatpush.msra.mxu0 %v386
    %1200 = vmatpush.msra.mxu0 %v382
    %1201 = vmatpush.msra.mxu0 %v378
    %1202 = vmatpush.msra.mxu0 %v374
    %1203 = vmatpush.msra.mxu0 %v370
    %1204 = vmatpush.msra.mxu0 %v366
    %1205 = vmatpush.msra.mxu0 %v362
    %1206 = vmatpush.msra.mxu0 %v358
    %1207 = vmatpush.msra.mxu0 %v354
    %1208 = vmatmul.f32.gmra.mxu0 %v1166
    %v1209 = vpop.f32.mrf.mxu0
    %v1210 = vadd.f32 0.0, %v1209
    %1211 = vdwg.mxu0
    %1212 = vmatpush.msra.mxu0 %v415
    %1213 = vmatpush.msra.mxu0 %v411
    %1214 = vmatpush.msra.mxu0 %v407
    %1215 = vmatpush.msra.mxu0 %v403
    %1216 = vmatpush.msra.mxu0 %v399
    %1217 = vmatpush.msra.mxu0 %v395
    %1218 = vmatpush.msra.mxu0 %v391
    %1219 = vmatpush.msra.mxu0 %v387
    %1220 = vmatpush.msra.mxu0 %v383
    %1221 = vmatpush.msra.mxu0 %v379
    %1222 = vmatpush.msra.mxu0 %v375
    %1223 = vmatpush.msra.mxu0 %v371
    %1224 = vmatpush.msra.mxu0 %v367
    %1225 = vmatpush.msra.mxu0 %v363
    %1226 = vmatpush.msra.mxu0 %v359
    %1227 = vmatpush.msra.mxu0 %v355
    %1228 = vmatmul.f32.gmra.mxu0 %v1166
    %v1229 = vpop.f32.mrf.mxu0
    %v1230 = vadd.f32 0.0, %v1229
    %1231 = vdwg.mxu0
    %1232 = vmatpush.msra.mxu0 %v416
    %1233 = vmatpush.msra.mxu0 %v412
    %1234 = vmatpush.msra.mxu0 %v408
    %1235 = vmatpush.msra.mxu0 %v404
    %1236 = vmatpush.msra.mxu0 %v400
    %1237 = vmatpush.msra.mxu0 %v396
    %1238 = vmatpush.msra.mxu0 %v392
    %1239 = vmatpush.msra.mxu0 %v388
    %1240 = vmatpush.msra.mxu0 %v384
    %1241 = vmatpush.msra.mxu0 %v380
    %1242 = vmatpush.msra.mxu0 %v376
    %1243 = vmatpush.msra.mxu0 %v372
    %1244 = vmatpush.msra.mxu0 %v368
    %1245 = vmatpush.msra.mxu0 %v364
    %1246 = vmatpush.msra.mxu0 %v360
    %1247 = vmatpush.msra.mxu0 %v356
    %1248 = vmatmul.f32.gmra.mxu0 %v1166
    %v1249 = vpop.f32.mrf.mxu0
    %v1250 = vadd.f32 0.0, %v1249
    %1251 = vdwg.mxu0
    %v1252 = vadd.f32 %v1168, %v1190
    %v1253 = vadd.f32 %v1169, %v1210
    %v1254 = vadd.f32 %v1170, %v1230
    %v1255 = vadd.f32 %v1171, %v1250
    %v1256 = vmul.f32 %v1252, 0.5
    %v1257 = vtanh.pop %v1256
    %v1258 = vmul.f32 %v1257, 0.5
    %v1259 = vadd.f32 %v1258, 0.5
    %v1260 = vmul.f32 %v1253, 0.5
    %v1261 = vtanh.pop %v1260
    %v1262 = vmul.f32 %v1261, 0.5
    %v1263 = vadd.f32 %v1262, 0.5
    %v1264 = vtanh.pop %v1254
    %v1265 = vmul.f32 %v1255, 0.5
    %v1266 = vtanh.pop %v1265
    %v1267 = vmul.f32 %v1266, 0.5
    %v1268 = vadd.f32 %v1267, 0.5
    %v1269 = vmul.f32 %v1263, %v1164
    %v1270 = vmul.f32 %v1259, %v1264
    %v1271 = vadd.f32 %v1269, %v1270
    %v1272 = vtanh.pop %v1271
    %v1273 = vmul.f32 %v1268, %v1272
    %1274 = vst [vmem:[#allocation2] sm:$0xff] %v1273
    %1275 = vst [vmem:[#allocation3] sm:$0xff] %v1271
    // Predicated region
    $region50: #{tpu_custom_call.1} parent=1 // pred_check
      %p1276 = pneg %p100
    $region51: #{tpu_custom_call.1} parent=1 // pred_check_branch
      %1278 = sbr.rel (%p1276) target = $region53
    $region52: #{tpu_custom_call.1} parent=1 // pred_region
      %v1279 = vld [vmem:[#allocation13] sm:$0xff]
      %v1280 = vld [vmem:[#allocation13 + $0x8] sm:$0xff]
      %v1281 = vld [vmem:[#allocation13 + $0x10] sm:$0xff]
      %v1282 = vld [vmem:[#allocation13 + $0x18] sm:$0xff]
      %v1283 = vld [vmem:[#allocation13 + $0x20] sm:$0xff]
      %v1284 = vld [vmem:[#allocation13 + $0x28] sm:$0xff]
      %v1285 = vld [vmem:[#allocation13 + $0x30] sm:$0xff]
      %v1286 = vld [vmem:[#allocation13 + $0x38] sm:$0xff]
      %v1287 = vld [vmem:[#allocation13 + $0x40] sm:$0xff]
      %v1288 = vld [vmem:[#allocation13 + $0x48] sm:$0xff]
      %v1289 = vld [vmem:[#allocation13 + $0x50] sm:$0xff]
      %v1290 = vld [vmem:[#allocation13 + $0x58] sm:$0xff]
      %v1291 = vld [vmem:[#allocation13 + $0x60] sm:$0xff]
      %v1292 = vld [vmem:[#allocation13 + $0x68] sm:$0xff]
      %v1293 = vld [vmem:[#allocation13 + $0x70] sm:$0xff]
      %v1294 = vld [vmem:[#allocation13 + $0x78] sm:$0xff]
      %v1295 = vld [vmem:[%s5] sm:$0x1]
      %v1297 = vperm.slane %v1295, 0
      %1299 = vmatpush.msra.mxu0 %v1294
      %1300 = vmatpush.msra.mxu0 %v1293
      %1301 = vmatpush.msra.mxu0 %v1292
      %1302 = vmatpush.msra.mxu0 %v1291
      %1303 = vmatpush.msra.mxu0 %v1290
      %1304 = vmatpush.msra.mxu0 %v1289
      %1305 = vmatpush.msra.mxu0 %v1288
      %1306 = vmatpush.msra.mxu0 %v1287
      %1307 = vmatpush.msra.mxu0 %v1286
      %1308 = vmatpush.msra.mxu0 %v1285
      %1309 = vmatpush.msra.mxu0 %v1284
      %1310 = vmatpush.msra.mxu0 %v1283
      %1311 = vmatpush.msra.mxu0 %v1282
      %1312 = vmatpush.msra.mxu0 %v1281
      %1313 = vmatpush.msra.mxu0 %v1280
      %1314 = vmatpush.msra.mxu0 %v1279
      %1315 = vmatmul.f32.gmra.mxu0 %v1273
      %v1316 = vpop.f32.mrf.mxu0
      %v1317 = vadd.f32 %v1297, %v1316
      %1318 = vdwg.mxu0
      %1319 = vst [vmem:[#allocation14] sm:$0xff] %v1317
    $region53: #{tpu_custom_call.1} parent=1 // pred_fallthru
      _
    // Predicated region
    $region54: #{tpu_custom_call.1} parent=1 // pred_check
      _
    $region55: #{tpu_custom_call.1} parent=1 // pred_check_branch
      %1321 = sbr.rel (0) target = $region57
    $region56: #{tpu_custom_call.1} parent=1 // pred_region
      %1323 = vsyncadd [#allocation7], 0
      %s1325 = sshll.u32 [#allocation14], 4
      %s1326 = int_to_ptr.vmem [resolvable:$true] %s1325
      %s1327 = sshll.u32 %s6, 4
      %s1328 = int_to_ptr.hbm [resolvable:$true] %s1327
      %1330 = dma.vmem_to_hbm [thread:$0]  %s1326, 128, %s1328, [#allocation7]
    $region57: #{tpu_custom_call.1} parent=1 // pred_fallthru
      _
    // Predicated region
    $region58: #{tpu_custom_call.1} parent=1 // pred_check
      _
    $region59: #{tpu_custom_call.1} parent=1 // pred_check_branch
      %1332 = sbr.rel (0) target = $region61
    $region60: #{tpu_custom_call.1} parent=1 // pred_region
      %1334 = dma.done [#allocation7], 128
    $region61: #{tpu_custom_call.1} parent=1 // pred_fallthru
      _
    %1335 = vsyncpa [#allocation6], 1
    %1336 = vsyncpa [#allocation9], 1
    %1337 = vsyncpa [#allocation12], 1
    %1338 = vsyncpa [#allocation7], 1

</llo_original>
